<compile_context>
chip_gen: v5e
topology: v5e:2x2
jax: 0.10.0
libtpu: 0.0.40
codegen_flags: <defaults>
</compile_context>

<pallas_src>
import functools

import jax
import jax.numpy as jnp
from jax import lax
from jax.experimental import pallas as pl
from jax.experimental.pallas import tpu as pltpu

_IN_EPS = 1e-3   # InstanceNorm2d eps used by the module
_BN_EPS = 1e-5   # BatchNorm2d default eps


# ---------------------------------------------------------------------------
# Kernels.  grid = (B // bt,); each step sees a (bt, channels, n_pad) block
# (points on lanes, channels on sublanes, bt batch rows per step).
# ---------------------------------------------------------------------------

def k1_instnorm_stats(x_ref, s_ref, *, n_true):
    """Stage 1: per-(b, c) mean / variance of x over the points axis.

    InstanceNorm1 + BatchNorm1 are folded into a per-(b,c) scale/shift in the
    wrapper, so no normalized activation is written back to HBM here."""
    x = x_ref[...].astype(jnp.float32)                      # (bt, C, Npad)
    inv_n = 1.0 / n_true
    mu = jnp.sum(x, axis=-1, keepdims=True) * inv_n         # zero-padded lanes are harmless
    ex2 = jnp.sum(x * x, axis=-1, keepdims=True) * inv_n
    var = jnp.maximum(ex2 - mu * mu, 0.0)                   # single-pass variance
    s_ref[:, :, 0:1] = mu
    s_ref[:, :, 1:2] = var


def k2_conv1_bn2stats(x_ref, sc1_ref, sh1_ref, mask_ref, w1_ref, b1_ref,
                      y_ref, s_ref, *, bt):
    """Stage 2: fused IN1+BN1 affine + ReLU + 1x1 conv (C->O) + BN2(points) sums."""
    mask = mask_ref[...]                                    # (1, Npad), 1 on real points
    w1 = w1_ref[...]                                        # (O, C)
    b1 = b1_ref[...]                                        # (O, 1)
    ps = jnp.zeros_like(mask)
    pss = jnp.zeros_like(mask)
    for b in range(bt):                                     # static unroll over batch block
        h = jnp.maximum(x_ref[b].astype(jnp.float32) * sc1_ref[b] + sh1_ref[b], 0.0)
        o = jnp.dot(w1, h.astype(w1.dtype), preferred_element_type=jnp.float32)
        o = (o + b1) * mask                                 # keep padded lanes exactly 0
        y_ref[b] = o.astype(y_ref.dtype)                    # bf16 inter-stage activation
        ps = ps + jnp.sum(o, axis=0, keepdims=True)         # per-point sum
        pss = pss + jnp.sum(o * o, axis=0, keepdims=True)   # per-point sum of squares
    s_ref[0:1, :] = ps
    s_ref[1:2, :] = pss


def k3_conv2_instnorm_stats(y_ref, sc2_ref, sh2_ref, mask_ref, w2t_ref, b2_ref,
                            u_ref, s_ref, *, bt, n_true):
    """Stage 3: BN2 affine + ReLU + points-mixing conv + residual + InstanceNorm(O).

    All bt batch rows are stacked along M (sublanes), so the single matmul runs
    at M = bt*O.  BN3 batch stats are derived analytically in the wrapper from
    the per-(b,o) variance emitted here (no second reduction pass over u)."""
    O = y_ref.shape[1]
    n_pad = y_ref.shape[-1]
    y = y_ref[...].astype(jnp.float32).reshape(bt * O, n_pad)   # free merge of (bt, O)
    z = jnp.maximum(y * sc2_ref[...] + sh2_ref[...], 0.0)       # BN2 per point + ReLU
    # conv2 mixes points: z2[r, p] = sum_q z[r, q] * w2[p, q] = (z @ w2.T)[r, p]
    z2 = jnp.dot(z.astype(w2t_ref.dtype), w2t_ref[...],
                 preferred_element_type=jnp.float32)            # (bt*O, Npad)
    t = y + z2 + b2_ref[...]                                    # residual inside conv2 branch
    inv_n = 1.0 / n_true
    mu = jnp.sum(t, axis=-1, keepdims=True) * inv_n
    var = jnp.maximum(jnp.sum(t * t, axis=-1, keepdims=True) * inv_n - mu * mu, 0.0)
    u = (t - mu) * lax.rsqrt(var + _IN_EPS) * mask_ref[...]     # InstanceNorm2d(O), masked
    u_ref[...] = u.reshape(bt, O, n_pad).astype(u_ref.dtype)
    s_ref[...] = var.reshape(bt, O, 1)                          # per-(b,o) var of t


def k4_conv3_residual(u_ref, x_ref, sc3_ref, sh3_ref, w3_ref, b3_ref, out_ref, *, bt):
    """Stage 4: BN3 affine + ReLU + 1x1 conv (O->O) + residual with the input."""
    w3 = w3_ref[...]
    b3 = b3_ref[...]
    sc3 = sc3_ref[...]
    sh3 = sh3_ref[...]
    for b in range(bt):
        h = jnp.maximum(u_ref[b].astype(jnp.float32) * sc3 + sh3, 0.0)
        o = jnp.dot(w3, h.astype(w3.dtype), preferred_element_type=jnp.float32)
        out_ref[b] = (o + b3 + x_ref[b].astype(jnp.float32)).astype(out_ref.dtype)


# ---------------------------------------------------------------------------
# Wrapper helpers.
# ---------------------------------------------------------------------------

def _block_spec(bt, inner):
    """Tile over batch: bt batch rows + full inner dims per grid step."""
    nd = len(inner)
    return pl.BlockSpec((bt,) + tuple(inner), lambda g, _nd=nd: (g,) + (0,) * _nd)


def _step_spec(inner):
    """One (squeezed) block per grid step (partial-sum outputs)."""
    nd = len(inner)
    return pl.BlockSpec((None,) + tuple(inner), lambda g, _nd=nd: (g,) + (0,) * _nd)


def _full_spec(shape):
    """Whole-array block, fetched once and kept resident across grid steps."""
    nd = len(shape)
    return pl.BlockSpec(tuple(shape), lambda g, _nd=nd: (0,) * _nd)


def _pick_bt(batch, rows, n_pad, target_bytes=4 << 20):
    """Largest bt dividing batch with ~target-size blocks and >=2 grid steps."""
    row_bytes = rows * n_pad * 4
    best = 1
    for bt in range(1, batch + 1):
        if batch % bt:
            continue
        if bt > 1 and bt * row_bytes > target_bytes:
            break
        if batch > 1 and batch // bt < 2:
            continue
        best = bt
    return best


def _vmem_params(step_bytes, resident_bytes=0):
    """Generation-aware VMEM limit: leave headroom below physical capacity."""
    try:
        cap = int(getattr(pltpu.get_tpu_info(), "vmem_capacity_bytes", 0)) or (64 << 20)
    except Exception:
        cap = 64 << 20                                      # conservative (v7x per-TC)
    # Double-buffered per-step blocks; resident (grid-invariant) weights are
    # budgeted at 2x because the default pipeliner may double-buffer them too.
    limit = 2 * step_bytes + 2 * resident_bytes + (6 << 20)
    hard_cap = max(cap - (16 << 20), 32 << 20)              # ~48 MiB v7x, ~112 MiB v5e/v6e
    limit = int(min(max(limit, 8 << 20), hard_cap))
    return pltpu.CompilerParams(dimension_semantics=("parallel",),
                                vmem_limit_bytes=limit)


def _bn_scale_shift(sum_, sumsq, count, gamma, beta):
    """Fold train-mode BatchNorm batch stats + affine into (scale, shift)."""
    mean = sum_ / count
    var = jnp.maximum(sumsq / count - mean * mean, 0.0)
    scale = gamma * lax.rsqrt(var + _BN_EPS)
    shift = beta - mean * scale
    return scale, shift


def init_params(key, channels, points, out_channels=None, dtype=jnp.float32):
    if out_channels is None:
        out_channels = channels
    ks = jax.random.split(key, 12)
    return dict(
        # conv1: Conv2d(channels -> out_channels, 1x1)
        w1=(jax.random.normal(ks[0], (out_channels, channels)) * 0.1).astype(dtype),
        b1=(jax.random.normal(ks[1], (out_channels, 1)) * 0.1).astype(dtype),
        g1=(1.0 + 0.1 * jax.random.normal(ks[2], (channels, 1))).astype(dtype),
        be1=(0.1 * jax.random.normal(ks[3], (channels, 1))).astype(dtype),
        # conv2: Conv2d(points -> points, 1x1)
        w2=(jax.random.normal(ks[4], (points, points)) * 0.1).astype(dtype),
        b2=(jax.random.normal(ks[5], (points, 1)) * 0.1).astype(dtype),
        g2=(1.0 + 0.1 * jax.random.normal(ks[6], (points, 1))).astype(dtype),
        be2=(0.1 * jax.random.normal(ks[7], (points, 1))).astype(dtype),
        # conv3: Conv2d(out_channels -> out_channels, 1x1)
        w3=(jax.random.normal(ks[8], (out_channels, out_channels)) * 0.1).astype(dtype),
        b3=(jax.random.normal(ks[9], (out_channels, 1)) * 0.1).astype(dtype),
        g3=(1.0 + 0.1 * jax.random.normal(ks[10], (out_channels, 1))).astype(dtype),
        be3=(0.1 * jax.random.normal(ks[11], (out_channels, 1))).astype(dtype),
    )


def oafilter_forward(x, params, *, use_bf16_matmul=True):
    """x: (B, channels, points, 1) -> (B, out_channels, points, 1)."""
    B, C, N, W = x.shape
    assert W == 1, "OAFilter expects a trailing spatial dim of size 1"
    O = params["w1"].shape[0]
    assert O == C, "out_channels != channels (shot_cut path) not supported"

    n_pad = pl.cdiv(N, 128) * 128
    pad = n_pad - N
    f32 = jnp.float32
    mm_dtype = jnp.bfloat16 if use_bf16_matmul else jnp.float32
    mm_bytes = 2 if use_bf16_matmul else 4
    act_dtype = mm_dtype          # inter-stage activations stored at matmul precision
    act_bytes = mm_bytes

    bt = _pick_bt(B, max(C, O), n_pad)
    G = B // bt
    grid = (G,)

    # ---- one-time parameter / input preprocessing (tiny, outside the kernels) ----
    x3 = x[..., 0]
    if pad:
        x3 = jnp.pad(x3, ((0, 0), (0, 0), (0, pad)))        # zero-pad points axis
    mask = (jnp.arange(n_pad) < N).astype(f32).reshape(1, n_pad)

    w1 = params["w1"].astype(mm_dtype)                      # (O, C)
    w3 = params["w3"].astype(mm_dtype)                      # (O, O)
    w2 = params["w2"].astype(f32)                           # (P, P)
    b2 = params["b2"][:, 0].astype(f32)
    g2 = params["g2"][:, 0].astype(f32)
    be2 = params["be2"][:, 0].astype(f32)
    if pad:
        w2 = jnp.pad(w2, ((0, pad), (0, pad)))              # zero padded rows/cols
        b2 = jnp.pad(b2, (0, pad))
        g2 = jnp.pad(g2, (0, pad))
        be2 = jnp.pad(be2, (0, pad))
    w2t = w2.T.astype(mm_dtype)                             # (q, p): conv2 = plain matmul
    b2r = b2.reshape(1, n_pad)
    b1 = params["b1"].astype(f32)
    b3 = params["b3"].astype(f32)
    g1 = params["g1"][:, 0].astype(f32)
    be1 = params["be1"][:, 0].astype(f32)
    g3 = params["g3"][:, 0].astype(f32)
    be3 = params["be3"][:, 0].astype(f32)

    # ------------- stage 1: per-(b,c) mean/var of x (stats only) -------------
    blk1 = bt * C * n_pad * 4 + bt * C * 2 * 4
    s1 = pl.pallas_call(
        functools.partial(k1_instnorm_stats, n_true=N),
        grid=grid,
        in_specs=[_block_spec(bt, (C, n_pad))],
        out_specs=_block_spec(bt, (C, 2)),
        out_shape=jax.ShapeDtypeStruct((B, C, 2), f32),
        compiler_params=_vmem_params(blk1),
        cost_estimate=pl.CostEstimate(flops=4 * B * C * n_pad, transcendentals=0,
                                      bytes_accessed=B * C * n_pad * 4),
    )(x3)

    mu1 = s1[:, :, 0]                                        # (B, C)
    var1 = s1[:, :, 1]
    a1 = lax.rsqrt(var1 + _IN_EPS)                           # IN1 per-(b,c) scale
    # For instance-normalized y: mean_{b,n}(y) == 0, E[y^2] = mean_b(var/(var+eps)).
    bn1_var = jnp.mean(var1 * (a1 * a1), axis=0)             # (C,)
    sc1 = a1 * (g1 * lax.rsqrt(bn1_var + _BN_EPS))[None, :]  # fused IN1+BN1 scale (B, C)
    sh1 = be1[None, :] - mu1 * sc1                           # fused shift        (B, C)
    sc1 = sc1[:, :, None]
    sh1 = sh1[:, :, None]

    # ------------- stage 2: IN1+BN1 + ReLU + conv1 (C->O) + BN2 sums ----------
    blk2 = bt * C * n_pad * 4 + bt * O * n_pad * act_bytes + 2 * n_pad * 4 + 2 * bt * C * 4
    res2 = O * C * mm_bytes + (O + n_pad) * 4
    y2, s2 = pl.pallas_call(
        functools.partial(k2_conv1_bn2stats, bt=bt),
        grid=grid,
        in_specs=[_block_spec(bt, (C, n_pad)),
                  _block_spec(bt, (C, 1)), _block_spec(bt, (C, 1)),
                  _full_spec((1, n_pad)),
                  _full_spec((O, C)), _full_spec((O, 1))],
        out_specs=[_block_spec(bt, (O, n_pad)), _step_spec((2, n_pad))],
        out_shape=[jax.ShapeDtypeStruct((B, O, n_pad), act_dtype),
                   jax.ShapeDtypeStruct((G, 2, n_pad), f32)],
        compiler_params=_vmem_params(blk2, res2),
        cost_estimate=pl.CostEstimate(flops=2 * B * O * C * n_pad, transcendentals=0,
                                      bytes_accessed=B * n_pad * (C * 4 + O * act_bytes)),
    )(x3, sc1, sh1, mask, w1, b1)

    s2 = jnp.sum(s2, axis=0)                                 # (2, n_pad)
    sc2, sh2 = _bn_scale_shift(s2[0], s2[1], B * O, g2, be2)
    sc2 = sc2.reshape(1, n_pad)
    sh2 = sh2.reshape(1, n_pad)

    # --- stage 3: BN2 + ReLU + points-mixing conv + residual + IN(O) ----------
    blk3 = 2 * bt * O * n_pad * act_bytes + bt * O * 4
    res3 = n_pad * n_pad * mm_bytes + 4 * n_pad * 4
    u3, s3 = pl.pallas_call(
        functools.partial(k3_conv2_instnorm_stats, bt=bt, n_true=N),
        grid=grid,
        in_specs=[_block_spec(bt, (O, n_pad)),
                  _full_spec((1, n_pad)), _full_spec((1, n_pad)),
                  _full_spec((1, n_pad)),
                  _full_spec((n_pad, n_pad)), _full_spec((1, n_pad))],
        out_specs=[_block_spec(bt, (O, n_pad)), _block_spec(bt, (O, 1))],
        out_shape=[jax.ShapeDtypeStruct((B, O, n_pad), act_dtype),
                   jax.ShapeDtypeStruct((B, O, 1), f32)],
        compiler_params=_vmem_params(blk3, res3),
        cost_estimate=pl.CostEstimate(flops=2 * B * O * n_pad * n_pad,
                                      transcendentals=B * O,
                                      bytes_accessed=2 * B * O * n_pad * act_bytes
                                      + n_pad * n_pad * mm_bytes),
    )(y2, sc2, sh2, mask, w2t, b2r)

    var3 = s3[:, :, 0]                                       # (B, O) per-(b,o) var of t
    bn3_var = jnp.mean(var3 / (var3 + _IN_EPS), axis=0)      # E[u^2] per channel (mean(u)=0)
    sc3 = (g3 * lax.rsqrt(bn3_var + _BN_EPS)).reshape(O, 1)
    sh3 = be3.reshape(O, 1)

    # ------------- stage 4: BN3 + ReLU + conv3 (O->O) + residual with x -------
    blk4 = bt * O * n_pad * act_bytes + 2 * bt * C * n_pad * x.dtype.itemsize
    res4 = O * O * mm_bytes + 3 * O * 4
    out = pl.pallas_call(
        functools.partial(k4_conv3_residual, bt=bt),
        grid=grid,
        in_specs=[_block_spec(bt, (O, n_pad)), _block_spec(bt, (C, n_pad)),
                  _full_spec((O, 1)), _full_spec((O, 1)),
                  _full_spec((O, O)), _full_spec((O, 1))],
        out_specs=_block_spec(bt, (C, n_pad)),
        out_shape=jax.ShapeDtypeStruct((B, C, n_pad), x.dtype),
        compiler_params=_vmem_params(blk4, res4),
        cost_estimate=pl.CostEstimate(flops=2 * B * O * O * n_pad, transcendentals=0,
                                      bytes_accessed=B * O * n_pad * (act_bytes + 8)),
    )(u3, x3, sc3, sh3, w3, b3)

    return out[:, :, :N, None]                               # drop lane padding, restore W


# ---------------------------------------------------------------------------
# Pure-JAX f32 reference (PyTorch train-mode forward) for a correctness check.
# ---------------------------------------------------------------------------

def oafilter_reference(x, params):
    x3 = x[..., 0].astype(jnp.float32)                       # (B, C, N)

    def inorm(v, eps):                                        # per (b, c) over N
        mu = v.mean(-1, keepdims=True)
        var = ((v - mu) ** 2).mean(-1, keepdims=True)
        return (v - mu) / jnp.sqrt(var + eps)

    def bnorm(v, g, b, eps):                                  # per dim-1 over (B, last)
        mu = v.mean((0, 2), keepdims=True)
        var = ((v - mu) ** 2).mean((0, 2), keepdims=True)
        return (v - mu) / jnp.sqrt(var + eps) * g[None] + b[None]

    y = inorm(x3, _IN_EPS)
    y = jnp.maximum(bnorm(y, params["g1"], params["be1"], _BN_EPS), 0.0)
    y = jnp.einsum('oc,bcn->bon', params["w1"], y) + params["b1"][None]
    t = jnp.swapaxes(y, 1, 2)                                 # (B, N, O)
    z = jnp.maximum(bnorm(t, params["g2"], params["be2"], _BN_EPS), 0.0)
    z = jnp.einsum('pq,bqo->bpo', params["w2"], z) + params["b2"][None]
    t = t + z
    u = jnp.swapaxes(t, 1, 2)                                 # (B, O, N)
    u = inorm(u, _IN_EPS)
    u = jnp.maximum(bnorm(u, params["g3"], params["be3"], _BN_EPS), 0.0)
    u = jnp.einsum('oc,bcn->bon', params["w3"], u) + params["b3"][None]
    return (u + x3)[..., None]


if __name__ == "__main__":
    key = jax.random.PRNGKey(0)
    k_x, k_p = jax.random.split(key)

    B, channels, points = 2, 8, 16
    x = jax.random.normal(k_x, (B, channels, points, 1), dtype=jnp.float32)
    params = init_params(k_p, channels, points)

    fwd = jax.jit(oafilter_forward, static_argnames=("use_bf16_matmul",))

    # Performance path: bf16 matmuls + bf16 inter-stage activations, f32 norm math.
    out = fwd(x, params)
    jax.block_until_ready(out)
    assert out.shape == (B, channels, points, 1)
    assert bool(jnp.all(jnp.isfinite(out)))

    # Correctness: f32 kernel path against the pure-JAX reference, bf16 loosely.
    out_f32 = fwd(x, params, use_bf16_matmul=False)
    jax.block_until_ready(out_f32)
    ref = oafilter_reference(x, params)
    err_f32 = float(jnp.max(jnp.abs(out_f32 - ref)))
    err_bf16 = float(jnp.max(jnp.abs(out - ref)))
    assert err_f32 < 5e-2, f"f32 kernel mismatch: {err_f32}"
    assert err_bf16 < 2e-1, f"bf16 kernel mismatch: {err_bf16}"

    print("KERNEL_OK")
</pallas_src>

<mosaic_0001>
module attributes {stable_mosaic.version = 11 : i64} {
  func.func @k1_instnorm_stats(%arg0: i32, %arg1: memref<1x8x128xf32, #tpu.memory_space<vmem>>, %arg2: memref<1x8x2xf32, #tpu.memory_space<vmem>>) attributes {dimension_semantics = [#tpu.dimension_semantics<parallel>], iteration_bounds = array<i64: 2>, scalar_prefetch = 0 : i64, scratch_operands = 0 : i64, tpu.core_type = #tpu.core_type<tc>, window_params = [{transform_indices = @transform_0, window_bounds = array<i64: 1, 8, 128>}, {transform_indices = @transform_1, window_bounds = array<i64: 1, 8, 2>}]} {
    %c0 = arith.constant 0 : index
    %c0_0 = arith.constant 0 : index
    %c0_1 = arith.constant 0 : index
    %0 = vector.load %arg1[%c0, %c0_0, %c0_1] : memref<1x8x128xf32, #tpu.memory_space<vmem>>, vector<1x8x128xf32>
    %cst = arith.constant dense<0.000000e+00> : vector<1x8xf32>
    %1 = vector.multi_reduction <add>, %0, %cst [2] : vector<1x8x128xf32> to vector<1x8xf32>
    %2 = vector.shape_cast %1 : vector<1x8xf32> to vector<1x8x1xf32>
    %cst_2 = arith.constant 6.250000e-02 : f32
    %3 = vector.broadcast %cst_2 : f32 to vector<1x8x1xf32>
    %4 = arith.mulf %2, %3 : vector<1x8x1xf32>
    %5 = arith.mulf %0, %0 : vector<1x8x128xf32>
    %cst_3 = arith.constant dense<0.000000e+00> : vector<1x8xf32>
    %6 = vector.multi_reduction <add>, %5, %cst_3 [2] : vector<1x8x128xf32> to vector<1x8xf32>
    %7 = vector.shape_cast %6 : vector<1x8xf32> to vector<1x8x1xf32>
    %cst_4 = arith.constant 6.250000e-02 : f32
    %8 = vector.broadcast %cst_4 : f32 to vector<1x8x1xf32>
    %9 = arith.mulf %7, %8 : vector<1x8x1xf32>
    %10 = arith.mulf %4, %4 : vector<1x8x1xf32>
    %11 = arith.subf %9, %10 : vector<1x8x1xf32>
    %cst_5 = arith.constant 0.000000e+00 : f32
    %12 = vector.broadcast %cst_5 : f32 to vector<1x8x1xf32>
    %13 = arith.maximumf %11, %12 : vector<1x8x1xf32>
    %c0_6 = arith.constant 0 : index
    %c0_7 = arith.constant 0 : index
    %c0_8 = arith.constant 0 : index
    %14 = vector.load %arg2[%c0_6, %c0_7, %c0_8] : memref<1x8x2xf32, #tpu.memory_space<vmem>>, vector<1x8x1xf32>
    tpu.vector_store %arg2[%c0_6, %c0_7, %c0_8], %4 {strides = array<i32>} : memref<1x8x2xf32, #tpu.memory_space<vmem>>, vector<1x8x1xf32>,
    %c0_9 = arith.constant 0 : index
    %c0_10 = arith.constant 0 : index
    %c1 = arith.constant 1 : index
    %15 = vector.load %arg2[%c0_9, %c0_10, %c1] : memref<1x8x2xf32, #tpu.memory_space<vmem>>, vector<1x8x1xf32>
    tpu.vector_store %arg2[%c0_9, %c0_10, %c1], %13 {strides = array<i32>} : memref<1x8x2xf32, #tpu.memory_space<vmem>>, vector<1x8x1xf32>,
    return
  }
  func.func @transform_0(%arg0: i32) -> (i32, i32, i32) {
    %c0_i32 = arith.constant 0 : i32
    %c0_i32_0 = arith.constant 0 : i32
    %c0_i32_1 = arith.constant 0 : i32
    return %arg0, %c0_i32, %c0_i32_0 : i32, i32, i32
  }
  func.func @transform_1(%arg0: i32) -> (i32, i32, i32) {
    %c0_i32 = arith.constant 0 : i32
    %c0_i32_0 = arith.constant 0 : i32
    %c0_i32_1 = arith.constant 0 : i32
    return %arg0, %c0_i32, %c0_i32_0 : i32, i32, i32
  }
}

module attributes {stable_mosaic.version = 11 : i64} {
  func.func @k2_conv1_bn2stats(%arg0: i32, %arg1: memref<1x8x128xf32, #tpu.memory_space<vmem>>, %arg2: memref<1x8x1xf32, #tpu.memory_space<vmem>>, %arg3: memref<1x8x1xf32, #tpu.memory_space<vmem>>, %arg4: memref<1x128xf32, #tpu.memory_space<vmem>>, %arg5: memref<8x8xbf16, #tpu.memory_space<vmem>>, %arg6: memref<8x1xf32, #tpu.memory_space<vmem>>, %arg7: memref<1x8x128xbf16, #tpu.memory_space<vmem>>, %arg8: memref<1x2x128xf32, #tpu.memory_space<vmem>>) attributes {dimension_semantics = [#tpu.dimension_semantics<parallel>], iteration_bounds = array<i64: 2>, scalar_prefetch = 0 : i64, scratch_operands = 0 : i64, tpu.core_type = #tpu.core_type<tc>, window_params = [{transform_indices = @transform_0, window_bounds = array<i64: 1, 8, 128>}, {transform_indices = @transform_1, window_bounds = array<i64: 1, 8, 1>}, {transform_indices = @transform_2, window_bounds = array<i64: 1, 8, 1>}, {pipeline_mode = #tpu.pipeline_mode<synchronous>, transform_indices = @transform_3, window_bounds = array<i64: 1, 128>}, {pipeline_mode = #tpu.pipeline_mode<synchronous>, transform_indices = @transform_4, window_bounds = array<i64: 8, 8>}, {pipeline_mode = #tpu.pipeline_mode<synchronous>, transform_indices = @transform_5, window_bounds = array<i64: 8, 1>}, {transform_indices = @transform_6, window_bounds = array<i64: 1, 8, 128>}, {transform_indices = @transform_7, window_bounds = array<i64: 1, 2, 128>}]} {
    %c0 = arith.constant 0 : index
    %c0_0 = arith.constant 0 : index
    %0 = vector.load %arg4[%c0, %c0_0] : memref<1x128xf32, #tpu.memory_space<vmem>>, vector<1x128xf32>
    %c0_1 = arith.constant 0 : index
    %c0_2 = arith.constant 0 : index
    %1 = vector.load %arg5[%c0_1, %c0_2] : memref<8x8xbf16, #tpu.memory_space<vmem>>, vector<8x8xbf16>
    %c0_3 = arith.constant 0 : index
    %c0_4 = arith.constant 0 : index
    %2 = vector.load %arg6[%c0_3, %c0_4] : memref<8x1xf32, #tpu.memory_space<vmem>>, vector<8x1xf32>
    %cst = arith.constant 0.000000e+00 : f32
    %3 = vector.broadcast %cst : f32 to vector<1x128xf32>
    %cst_5 = arith.constant 0.000000e+00 : f32
    %4 = vector.broadcast %cst_5 : f32 to vector<1x128xf32>
    %c0_6 = arith.constant 0 : index
    %c0_7 = arith.constant 0 : index
    %c0_8 = arith.constant 0 : index
    %5 = vector.load %arg1[%c0_6, %c0_7, %c0_8] : memref<1x8x128xf32, #tpu.memory_space<vmem>>, vector<1x8x128xf32>
    %6 = vector.shape_cast %5 : vector<1x8x128xf32> to vector<8x128xf32>
    %c0_9 = arith.constant 0 : index
    %c0_10 = arith.constant 0 : index
    %c0_11 = arith.constant 0 : index
    %7 = vector.load %arg2[%c0_9, %c0_10, %c0_11] : memref<1x8x1xf32, #tpu.memory_space<vmem>>, vector<1x8x1xf32>
    %8 = vector.shape_cast %7 : vector<1x8x1xf32> to vector<8x1xf32>
    %9 = vector.broadcast %8 : vector<8x1xf32> to vector<8x128xf32>
    %10 = arith.mulf %6, %9 : vector<8x128xf32>
    %c0_12 = arith.constant 0 : index
    %c0_13 = arith.constant 0 : index
    %c0_14 = arith.constant 0 : index
    %11 = vector.load %arg3[%c0_12, %c0_13, %c0_14] : memref<1x8x1xf32, #tpu.memory_space<vmem>>, vector<1x8x1xf32>
    %12 = vector.shape_cast %11 : vector<1x8x1xf32> to vector<8x1xf32>
    %13 = vector.broadcast %12 : vector<8x1xf32> to vector<8x128xf32>
    %14 = arith.addf %10, %13 : vector<8x128xf32>
    %cst_15 = arith.constant 0.000000e+00 : f32
    %15 = vector.broadcast %cst_15 : f32 to vector<8x128xf32>
    %16 = arith.maximumf %14, %15 : vector<8x128xf32>
    %17 = arith.truncf %16 : vector<8x128xf32> to vector<8x128xbf16>
    %cst_16 = arith.constant dense<0.000000e+00> : vector<8x128xf32>
    %18 = tpu.matmul %1, %17, %cst_16 {dimension_numbers = #tpu.dot_dimension_numbers<[1], [0], [0], [1], [0, 0, 1, 1], [], []>} : vector<8x8xbf16>, vector<8x128xbf16>, vector<8x128xf32> -> vector<8x128xf32>
    %19 = vector.broadcast %2 : vector<8x1xf32> to vector<8x128xf32>
    %20 = arith.addf %18, %19 : vector<8x128xf32>
    %21 = vector.broadcast %0 : vector<1x128xf32> to vector<8x128xf32>
    %22 = arith.mulf %20, %21 : vector<8x128xf32>
    %23 = arith.truncf %22 : vector<8x128xf32> to vector<8x128xbf16>
    %c0_17 = arith.constant 0 : index
    %c0_18 = arith.constant 0 : index
    %c0_19 = arith.constant 0 : index
    %24 = vector.load %arg7[%c0_17, %c0_18, %c0_19] : memref<1x8x128xbf16, #tpu.memory_space<vmem>>, vector<1x8x128xbf16>
    %25 = vector.shape_cast %24 : vector<1x8x128xbf16> to vector<8x128xbf16>
    %26 = vector.shape_cast %23 : vector<8x128xbf16> to vector<1x8x128xbf16>
    tpu.vector_store %arg7[%c0_17, %c0_18, %c0_19], %26 {strides = array<i32>} : memref<1x8x128xbf16, #tpu.memory_space<vmem>>, vector<1x8x128xbf16>,
    %cst_20 = arith.constant dense<0.000000e+00> : vector<128xf32>
    %27 = vector.multi_reduction <add>, %22, %cst_20 [0] : vector<8x128xf32> to vector<128xf32>
    %28 = vector.shape_cast %27 : vector<128xf32> to vector<1x128xf32>
    %29 = arith.addf %3, %28 : vector<1x128xf32>
    %30 = arith.mulf %22, %22 : vector<8x128xf32>
    %cst_21 = arith.constant dense<0.000000e+00> : vector<128xf32>
    %31 = vector.multi_reduction <add>, %30, %cst_21 [0] : vector<8x128xf32> to vector<128xf32>
    %32 = vector.shape_cast %31 : vector<128xf32> to vector<1x128xf32>
    %33 = arith.addf %4, %32 : vector<1x128xf32>
    %c0_22 = arith.constant 0 : index
    %c0_23 = arith.constant 0 : index
    %c0_24 = arith.constant 0 : index
    %34 = vector.load %arg8[%c0_22, %c0_23, %c0_24] : memref<1x2x128xf32, #tpu.memory_space<vmem>>, vector<1x1x128xf32>
    %35 = vector.shape_cast %34 : vector<1x1x128xf32> to vector<1x128xf32>
    %36 = vector.shape_cast %29 : vector<1x128xf32> to vector<1x1x128xf32>
    tpu.vector_store %arg8[%c0_22, %c0_23, %c0_24], %36 {strides = array<i32>} : memref<1x2x128xf32, #tpu.memory_space<vmem>>, vector<1x1x128xf32>,
    %c0_25 = arith.constant 0 : index
    %c1 = arith.constant 1 : index
    %c0_26 = arith.constant 0 : index
    %37 = vector.load %arg8[%c0_25, %c1, %c0_26] : memref<1x2x128xf32, #tpu.memory_space<vmem>>, vector<1x1x128xf32>
    %38 = vector.shape_cast %37 : vector<1x1x128xf32> to vector<1x128xf32>
    %39 = vector.shape_cast %33 : vector<1x128xf32> to vector<1x1x128xf32>
    tpu.vector_store %arg8[%c0_25, %c1, %c0_26], %39 {strides = array<i32>} : memref<1x2x128xf32, #tpu.memory_space<vmem>>, vector<1x1x128xf32>,
    return
  }
  func.func @transform_0(%arg0: i32) -> (i32, i32, i32) {
    %c0_i32 = arith.constant 0 : i32
    %c0_i32_0 = arith.constant 0 : i32
    %c0_i32_1 = arith.constant 0 : i32
    return %arg0, %c0_i32, %c0_i32_0 : i32, i32, i32
  }
  func.func @transform_1(%arg0: i32) -> (i32, i32, i32) {
    %c0_i32 = arith.constant 0 : i32
    %c0_i32_0 = arith.constant 0 : i32
    %c0_i32_1 = arith.constant 0 : i32
    return %arg0, %c0_i32, %c0_i32_0 : i32, i32, i32
  }
  func.func @transform_2(%arg0: i32) -> (i32, i32, i32) {
    %c0_i32 = arith.constant 0 : i32
    %c0_i32_0 = arith.constant 0 : i32
    %c0_i32_1 = arith.constant 0 : i32
    return %arg0, %c0_i32, %c0_i32_0 : i32, i32, i32
  }
  func.func @transform_3(%arg0: i32) -> (i32, i32) {
    %c0_i32 = arith.constant 0 : i32
    %c0_i32_0 = arith.constant 0 : i32
    %c0_i32_1 = arith.constant 0 : i32
    return %c0_i32, %c0_i32_0 : i32, i32
  }
  func.func @transform_4(%arg0: i32) -> (i32, i32) {
    %c0_i32 = arith.constant 0 : i32
    %c0_i32_0 = arith.constant 0 : i32
    %c0_i32_1 = arith.constant 0 : i32
    return %c0_i32, %c0_i32_0 : i32, i32
  }
  func.func @transform_5(%arg0: i32) -> (i32, i32) {
    %c0_i32 = arith.constant 0 : i32
    %c0_i32_0 = arith.constant 0 : i32
    %c0_i32_1 = arith.constant 0 : i32
    return %c0_i32, %c0_i32_0 : i32, i32
  }
  func.func @transform_6(%arg0: i32) -> (i32, i32, i32) {
    %c0_i32 = arith.constant 0 : i32
    %c0_i32_0 = arith.constant 0 : i32
    %c0_i32_1 = arith.constant 0 : i32
    return %arg0, %c0_i32, %c0_i32_0 : i32, i32, i32
  }
  func.func @transform_7(%arg0: i32) -> (i32, i32, i32) {
    %c0_i32 = arith.constant 0 : i32
    %c0_i32_0 = arith.constant 0 : i32
    %c0_i32_1 = arith.constant 0 : i32
    return %arg0, %c0_i32, %c0_i32_0 : i32, i32, i32
  }
}

module attributes {stable_mosaic.version = 11 : i64} {
  func.func @k3_conv2_instnorm_stats(%arg0: i32, %arg1: memref<1x8x128xbf16, #tpu.memory_space<vmem>>, %arg2: memref<1x128xf32, #tpu.memory_space<vmem>>, %arg3: memref<1x128xf32, #tpu.memory_space<vmem>>, %arg4: memref<1x128xf32, #tpu.memory_space<vmem>>, %arg5: memref<128x128xbf16, #tpu.memory_space<vmem>>, %arg6: memref<1x128xf32, #tpu.memory_space<vmem>>, %arg7: memref<1x8x128xbf16, #tpu.memory_space<vmem>>, %arg8: memref<1x8x1xf32, #tpu.memory_space<vmem>>) attributes {dimension_semantics = [#tpu.dimension_semantics<parallel>], iteration_bounds = array<i64: 2>, scalar_prefetch = 0 : i64, scratch_operands = 0 : i64, tpu.core_type = #tpu.core_type<tc>, window_params = [{transform_indices = @transform_0, window_bounds = array<i64: 1, 8, 128>}, {pipeline_mode = #tpu.pipeline_mode<synchronous>, transform_indices = @transform_1, window_bounds = array<i64: 1, 128>}, {pipeline_mode = #tpu.pipeline_mode<synchronous>, transform_indices = @transform_2, window_bounds = array<i64: 1, 128>}, {pipeline_mode = #tpu.pipeline_mode<synchronous>, transform_indices = @transform_3, window_bounds = array<i64: 1, 128>}, {pipeline_mode = #tpu.pipeline_mode<synchronous>, transform_indices = @transform_4, window_bounds = array<i64: 128, 128>}, {pipeline_mode = #tpu.pipeline_mode<synchronous>, transform_indices = @transform_5, window_bounds = array<i64: 1, 128>}, {transform_indices = @transform_6, window_bounds = array<i64: 1, 8, 128>}, {transform_indices = @transform_7, window_bounds = array<i64: 1, 8, 1>}]} {
    %c0 = arith.constant 0 : index
    %c0_0 = arith.constant 0 : index
    %c0_1 = arith.constant 0 : index
    %0 = vector.load %arg1[%c0, %c0_0, %c0_1] : memref<1x8x128xbf16, #tpu.memory_space<vmem>>, vector<1x8x128xbf16>
    %1 = arith.extf %0 : vector<1x8x128xbf16> to vector<1x8x128xf32>
    %2 = vector.shape_cast %1 : vector<1x8x128xf32> to vector<8x128xf32>
    %c0_2 = arith.constant 0 : index
    %c0_3 = arith.constant 0 : index
    %3 = vector.load %arg2[%c0_2, %c0_3] : memref<1x128xf32, #tpu.memory_space<vmem>>, vector<1x128xf32>
    %4 = vector.broadcast %3 : vector<1x128xf32> to vector<8x128xf32>
    %5 = arith.mulf %2, %4 : vector<8x128xf32>
    %c0_4 = arith.constant 0 : index
    %c0_5 = arith.constant 0 : index
    %6 = vector.load %arg3[%c0_4, %c0_5] : memref<1x128xf32, #tpu.memory_space<vmem>>, vector<1x128xf32>
    %7 = vector.broadcast %6 : vector<1x128xf32> to vector<8x128xf32>
    %8 = arith.addf %5, %7 : vector<8x128xf32>
    %cst = arith.constant 0.000000e+00 : f32
    %9 = vector.broadcast %cst : f32 to vector<8x128xf32>
    %10 = arith.maximumf %8, %9 : vector<8x128xf32>
    %11 = arith.truncf %10 : vector<8x128xf32> to vector<8x128xbf16>
    %c0_6 = arith.constant 0 : index
    %c0_7 = arith.constant 0 : index
    %12 = vector.load %arg5[%c0_6, %c0_7] : memref<128x128xbf16, #tpu.memory_space<vmem>>, vector<128x128xbf16>
    %cst_8 = arith.constant dense<0.000000e+00> : vector<8x128xf32>
    %13 = tpu.matmul %11, %12, %cst_8 {dimension_numbers = #tpu.dot_dimension_numbers<[1], [0], [0], [1], [0, 0, 1, 1], [], []>} : vector<8x128xbf16>, vector<128x128xbf16>, vector<8x128xf32> -> vector<8x128xf32>
    %14 = arith.addf %2, %13 : vector<8x128xf32>
    %c0_9 = arith.constant 0 : index
    %c0_10 = arith.constant 0 : index
    %15 = vector.load %arg6[%c0_9, %c0_10] : memref<1x128xf32, #tpu.memory_space<vmem>>, vector<1x128xf32>
    %16 = vector.broadcast %15 : vector<1x128xf32> to vector<8x128xf32>
    %17 = arith.addf %14, %16 : vector<8x128xf32>
    %cst_11 = arith.constant dense<0.000000e+00> : vector<8xf32>
    %18 = vector.multi_reduction <add>, %17, %cst_11 [1] : vector<8x128xf32> to vector<8xf32>
    %19 = vector.shape_cast %18 : vector<8xf32> to vector<8x1xf32>
    %cst_12 = arith.constant 6.250000e-02 : f32
    %20 = vector.broadcast %cst_12 : f32 to vector<8x1xf32>
    %21 = arith.mulf %19, %20 : vector<8x1xf32>
    %22 = arith.mulf %17, %17 : vector<8x128xf32>
    %cst_13 = arith.constant dense<0.000000e+00> : vector<8xf32>
    %23 = vector.multi_reduction <add>, %22, %cst_13 [1] : vector<8x128xf32> to vector<8xf32>
    %24 = vector.shape_cast %23 : vector<8xf32> to vector<8x1xf32>
    %cst_14 = arith.constant 6.250000e-02 : f32
    %25 = vector.broadcast %cst_14 : f32 to vector<8x1xf32>
    %26 = arith.mulf %24, %25 : vector<8x1xf32>
    %27 = arith.mulf %21, %21 : vector<8x1xf32>
    %28 = arith.subf %26, %27 : vector<8x1xf32>
    %cst_15 = arith.constant 0.000000e+00 : f32
    %29 = vector.broadcast %cst_15 : f32 to vector<8x1xf32>
    %30 = arith.maximumf %28, %29 : vector<8x1xf32>
    %31 = vector.broadcast %21 : vector<8x1xf32> to vector<8x128xf32>
    %32 = arith.subf %17, %31 : vector<8x128xf32>
    %cst_16 = arith.constant 1.000000e-03 : f32
    %33 = vector.broadcast %cst_16 : f32 to vector<8x1xf32>
    %34 = arith.addf %30, %33 : vector<8x1xf32>
    %35 = math.rsqrt %34 : vector<8x1xf32>
    %36 = vector.broadcast %35 : vector<8x1xf32> to vector<8x128xf32>
    %37 = arith.mulf %32, %36 : vector<8x128xf32>
    %c0_17 = arith.constant 0 : index
    %c0_18 = arith.constant 0 : index
    %38 = vector.load %arg4[%c0_17, %c0_18] : memref<1x128xf32, #tpu.memory_space<vmem>>, vector<1x128xf32>
    %39 = vector.broadcast %38 : vector<1x128xf32> to vector<8x128xf32>
    %40 = arith.mulf %37, %39 : vector<8x128xf32>
    %41 = vector.shape_cast %40 : vector<8x128xf32> to vector<1x8x128xf32>
    %42 = arith.truncf %41 : vector<1x8x128xf32> to vector<1x8x128xbf16>
    %c0_19 = arith.constant 0 : index
    %c0_20 = arith.constant 0 : index
    %c0_21 = arith.constant 0 : index
    %43 = vector.load %arg7[%c0_19, %c0_20, %c0_21] : memref<1x8x128xbf16, #tpu.memory_space<vmem>>, vector<1x8x128xbf16>
    tpu.vector_store %arg7[%c0_19, %c0_20, %c0_21], %42 {strides = array<i32>} : memref<1x8x128xbf16, #tpu.memory_space<vmem>>, vector<1x8x128xbf16>,
    %44 = vector.shape_cast %30 : vector<8x1xf32> to vector<1x8x1xf32>
    %c0_22 = arith.constant 0 : index
    %c0_23 = arith.constant 0 : index
    %c0_24 = arith.constant 0 : index
    %45 = vector.load %arg8[%c0_22, %c0_23, %c0_24] : memref<1x8x1xf32, #tpu.memory_space<vmem>>, vector<1x8x1xf32>
    tpu.vector_store %arg8[%c0_22, %c0_23, %c0_24], %44 {strides = array<i32>} : memref<1x8x1xf32, #tpu.memory_space<vmem>>, vector<1x8x1xf32>,
    return
  }
  func.func @transform_0(%arg0: i32) -> (i32, i32, i32) {
    %c0_i32 = arith.constant 0 : i32
    %c0_i32_0 = arith.constant 0 : i32
    %c0_i32_1 = arith.constant 0 : i32
    return %arg0, %c0_i32, %c0_i32_0 : i32, i32, i32
  }
  func.func @transform_1(%arg0: i32) -> (i32, i32) {
    %c0_i32 = arith.constant 0 : i32
    %c0_i32_0 = arith.constant 0 : i32
    %c0_i32_1 = arith.constant 0 : i32
    return %c0_i32, %c0_i32_0 : i32, i32
  }
  func.func @transform_2(%arg0: i32) -> (i32, i32) {
    %c0_i32 = arith.constant 0 : i32
    %c0_i32_0 = arith.constant 0 : i32
    %c0_i32_1 = arith.constant 0 : i32
    return %c0_i32, %c0_i32_0 : i32, i32
  }
  func.func @transform_3(%arg0: i32) -> (i32, i32) {
    %c0_i32 = arith.constant 0 : i32
    %c0_i32_0 = arith.constant 0 : i32
    %c0_i32_1 = arith.constant 0 : i32
    return %c0_i32, %c0_i32_0 : i32, i32
  }
  func.func @transform_4(%arg0: i32) -> (i32, i32) {
    %c0_i32 = arith.constant 0 : i32
    %c0_i32_0 = arith.constant 0 : i32
    %c0_i32_1 = arith.constant 0 : i32
    return %c0_i32, %c0_i32_0 : i32, i32
  }
  func.func @transform_5(%arg0: i32) -> (i32, i32) {
    %c0_i32 = arith.constant 0 : i32
    %c0_i32_0 = arith.constant 0 : i32
    %c0_i32_1 = arith.constant 0 : i32
    return %c0_i32, %c0_i32_0 : i32, i32
  }
  func.func @transform_6(%arg0: i32) -> (i32, i32, i32) {
    %c0_i32 = arith.constant 0 : i32
    %c0_i32_0 = arith.constant 0 : i32
    %c0_i32_1 = arith.constant 0 : i32
    return %arg0, %c0_i32, %c0_i32_0 : i32, i32, i32
  }
  func.func @transform_7(%arg0: i32) -> (i32, i32, i32) {
    %c0_i32 = arith.constant 0 : i32
    %c0_i32_0 = arith.constant 0 : i32
    %c0_i32_1 = arith.constant 0 : i32
    return %arg0, %c0_i32, %c0_i32_0 : i32, i32, i32
  }
}

module attributes {stable_mosaic.version = 11 : i64} {
  func.func @k4_conv3_residual(%arg0: i32, %arg1: memref<1x8x128xbf16, #tpu.memory_space<vmem>>, %arg2: memref<1x8x128xf32, #tpu.memory_space<vmem>>, %arg3: memref<8x1xf32, #tpu.memory_space<vmem>>, %arg4: memref<8x1xf32, #tpu.memory_space<vmem>>, %arg5: memref<8x8xbf16, #tpu.memory_space<vmem>>, %arg6: memref<8x1xf32, #tpu.memory_space<vmem>>, %arg7: memref<1x8x128xf32, #tpu.memory_space<vmem>>) attributes {dimension_semantics = [#tpu.dimension_semantics<parallel>], iteration_bounds = array<i64: 2>, scalar_prefetch = 0 : i64, scratch_operands = 0 : i64, tpu.core_type = #tpu.core_type<tc>, window_params = [{transform_indices = @transform_0, window_bounds = array<i64: 1, 8, 128>}, {transform_indices = @transform_1, window_bounds = array<i64: 1, 8, 128>}, {pipeline_mode = #tpu.pipeline_mode<synchronous>, transform_indices = @transform_2, window_bounds = array<i64: 8, 1>}, {pipeline_mode = #tpu.pipeline_mode<synchronous>, transform_indices = @transform_3, window_bounds = array<i64: 8, 1>}, {pipeline_mode = #tpu.pipeline_mode<synchronous>, transform_indices = @transform_4, window_bounds = array<i64: 8, 8>}, {pipeline_mode = #tpu.pipeline_mode<synchronous>, transform_indices = @transform_5, window_bounds = array<i64: 8, 1>}, {transform_indices = @transform_6, window_bounds = array<i64: 1, 8, 128>}]} {
    %c0 = arith.constant 0 : index
    %c0_0 = arith.constant 0 : index
    %0 = vector.load %arg5[%c0, %c0_0] : memref<8x8xbf16, #tpu.memory_space<vmem>>, vector<8x8xbf16>
    %c0_1 = arith.constant 0 : index
    %c0_2 = arith.constant 0 : index
    %1 = vector.load %arg6[%c0_1, %c0_2] : memref<8x1xf32, #tpu.memory_space<vmem>>, vector<8x1xf32>
    %c0_3 = arith.constant 0 : index
    %c0_4 = arith.constant 0 : index
    %2 = vector.load %arg3[%c0_3, %c0_4] : memref<8x1xf32, #tpu.memory_space<vmem>>, vector<8x1xf32>
    %c0_5 = arith.constant 0 : index
    %c0_6 = arith.constant 0 : index
    %3 = vector.load %arg4[%c0_5, %c0_6] : memref<8x1xf32, #tpu.memory_space<vmem>>, vector<8x1xf32>
    %c0_7 = arith.constant 0 : index
    %c0_8 = arith.constant 0 : index
    %c0_9 = arith.constant 0 : index
    %4 = vector.load %arg1[%c0_7, %c0_8, %c0_9] : memref<1x8x128xbf16, #tpu.memory_space<vmem>>, vector<1x8x128xbf16>
    %5 = vector.shape_cast %4 : vector<1x8x128xbf16> to vector<8x128xbf16>
    %6 = arith.extf %5 : vector<8x128xbf16> to vector<8x128xf32>
    %7 = vector.broadcast %2 : vector<8x1xf32> to vector<8x128xf32>
    %8 = arith.mulf %6, %7 : vector<8x128xf32>
    %9 = vector.broadcast %3 : vector<8x1xf32> to vector<8x128xf32>
    %10 = arith.addf %8, %9 : vector<8x128xf32>
    %cst = arith.constant 0.000000e+00 : f32
    %11 = vector.broadcast %cst : f32 to vector<8x128xf32>
    %12 = arith.maximumf %10, %11 : vector<8x128xf32>
    %13 = arith.truncf %12 : vector<8x128xf32> to vector<8x128xbf16>
    %cst_10 = arith.constant dense<0.000000e+00> : vector<8x128xf32>
    %14 = tpu.matmul %0, %13, %cst_10 {dimension_numbers = #tpu.dot_dimension_numbers<[1], [0], [0], [1], [0, 0, 1, 1], [], []>} : vector<8x8xbf16>, vector<8x128xbf16>, vector<8x128xf32> -> vector<8x128xf32>
    %15 = vector.broadcast %1 : vector<8x1xf32> to vector<8x128xf32>
    %16 = arith.addf %14, %15 : vector<8x128xf32>
    %c0_11 = arith.constant 0 : index
    %c0_12 = arith.constant 0 : index
    %c0_13 = arith.constant 0 : index
    %17 = vector.load %arg2[%c0_11, %c0_12, %c0_13] : memref<1x8x128xf32, #tpu.memory_space<vmem>>, vector<1x8x128xf32>
    %18 = vector.shape_cast %17 : vector<1x8x128xf32> to vector<8x128xf32>
    %19 = arith.addf %16, %18 : vector<8x128xf32>
    %c0_14 = arith.constant 0 : index
    %c0_15 = arith.constant 0 : index
    %c0_16 = arith.constant 0 : index
    %20 = vector.load %arg7[%c0_14, %c0_15, %c0_16] : memref<1x8x128xf32, #tpu.memory_space<vmem>>, vector<1x8x128xf32>
    %21 = vector.shape_cast %20 : vector<1x8x128xf32> to vector<8x128xf32>
    %22 = vector.shape_cast %19 : vector<8x128xf32> to vector<1x8x128xf32>
    tpu.vector_store %arg7[%c0_14, %c0_15, %c0_16], %22 {strides = array<i32>} : memref<1x8x128xf32, #tpu.memory_space<vmem>>, vector<1x8x128xf32>,
    return
  }
  func.func @transform_0(%arg0: i32) -> (i32, i32, i32) {
    %c0_i32 = arith.constant 0 : i32
    %c0_i32_0 = arith.constant 0 : i32
    %c0_i32_1 = arith.constant 0 : i32
    return %arg0, %c0_i32, %c0_i32_0 : i32, i32, i32
  }
  func.func @transform_1(%arg0: i32) -> (i32, i32, i32) {
    %c0_i32 = arith.constant 0 : i32
    %c0_i32_0 = arith.constant 0 : i32
    %c0_i32_1 = arith.constant 0 : i32
    return %arg0, %c0_i32, %c0_i32_0 : i32, i32, i32
  }
  func.func @transform_2(%arg0: i32) -> (i32, i32) {
    %c0_i32 = arith.constant 0 : i32
    %c0_i32_0 = arith.constant 0 : i32
    %c0_i32_1 = arith.constant 0 : i32
    return %c0_i32, %c0_i32_0 : i32, i32
  }
  func.func @transform_3(%arg0: i32) -> (i32, i32) {
    %c0_i32 = arith.constant 0 : i32
    %c0_i32_0 = arith.constant 0 : i32
    %c0_i32_1 = arith.constant 0 : i32
    return %c0_i32, %c0_i32_0 : i32, i32
  }
  func.func @transform_4(%arg0: i32) -> (i32, i32) {
    %c0_i32 = arith.constant 0 : i32
    %c0_i32_0 = arith.constant 0 : i32
    %c0_i32_1 = arith.constant 0 : i32
    return %c0_i32, %c0_i32_0 : i32, i32
  }
  func.func @transform_5(%arg0: i32) -> (i32, i32) {
    %c0_i32 = arith.constant 0 : i32
    %c0_i32_0 = arith.constant 0 : i32
    %c0_i32_1 = arith.constant 0 : i32
    return %c0_i32, %c0_i32_0 : i32, i32
  }
  func.func @transform_6(%arg0: i32) -> (i32, i32, i32) {
    %c0_i32 = arith.constant 0 : i32
    %c0_i32_0 = arith.constant 0 : i32
    %c0_i32_1 = arith.constant 0 : i32
    return %arg0, %c0_i32, %c0_i32_0 : i32, i32, i32
  }
}

</mosaic_0001>

<llo_original>
// kernel: mul.4
$region0: #{mul.4}
  #allocation0 [shape = 's32[1]{0}', space=sflag, size = 0x4, scoped, tag = 'scoped memory for mul.4']
  %s0 = inlined_call_operand.vmem [shape: f32[8,1], index: 0, kind: input, shape index: {}]
  %s1 = inlined_call_operand.vmem [shape: f32[8,1], index: 1, kind: input, shape index: {}]
  %s2 = inlined_call_operand.vmem [shape: f32[8,1], index: 2, kind: output, shape index: {}]
  %v3 = vld [vmem:[%s0] sm:$0xff]
  %v4 = vld [vmem:[%s1] sm:$0xff]
  %5 = xla_tuple %v3, %v4
  %6 = xla_tuple %5
  %v7 = vmul.f32 %v3, %v4
  %8 = xla_tuple %v7
  %9 = vst [vmem:[%s2] sm:$0xff] %v7

// kernel: oafilter_forward.4
$region0: #{oafilter_forward.4}
  #allocation0 [shape = 'u32[]', space=smem, size = 0x4, offset = 0x4, fixed_abs, tag = 'smem constant byte address 0x4 - core index']
  #allocation1 [shape = 'u32[72,128]{1,0:T(1,128)}', space=vmem, size = 0x9000, scoped, tag = 'internal scratch']
  %s0 = inlined_call_operand.vmem [shape: f32[2,8,128], index: 0, kind: input, shape index: {}]
  %s1 = inlined_call_operand.vmem [shape: f32[2,8,2], index: 1, kind: output, shape index: {}]
  %s2 = sld [smem:[#allocation0]]
  $region37: #{oafilter_forward.4} parent=0
    _
  %s4 = ssub.s32 1, %s2
  %s5 = scalar_select 0, %s4, %s2
  loop: start=0, step=1, limit=4
  $region2: #{oafilter_forward.4} parent=0 // loop_pre_header
    _
  $region3: #{oafilter_forward.4} parent=0 // loop_header
    %s7 = sphi 0, %s11
    %p8 = scmp.ge.s32.totalorder %s7, 4
    %s17 = sphi 0, %s19
    %s20 = sphi 0, %s17
    %s21 = sphi 0, %s20
    %s37 = sphi 0, %s21
    %s43 = sphi 0, %s45
    %s46 = sphi 0, %s43
    %s47 = sphi 0, %s46
    %s63 = sphi 0, %s47
  $region4: #{oafilter_forward.4} parent=0 // loop_header_branch
    %10 = sbr.rel (%p8) target = $region8
  $region5: #{oafilter_forward.4} parent=0 // loop_body
    %s12 = ssub.s32 %s7, 1
    %s13 = ssub.s32 %s7, 2
    %s14 = sadd.s32 %s7, 1
    %s15 = ssub.s32 %s7, %s14
    %p16 = scmp.eq.s32.totalorder %s15, 0
    %s18 = sadd.s32 %s17, 1
    %s19 = scalar_select %p16, %s17, %s18
    %p22 = pneg %p16
    %p23 = scmp.eq.s32.totalorder %s7, 1
    %p24 = por %p22, %p23
    %p25 = scmp.ne.s32.totalorder %s17, %s20
    %p26 = scmp.eq.s32.totalorder %s7, 0
    %p27 = por %p25, %p26
    %p28 = scmp.ne.s32.totalorder %s17, %s20
    %p29 = scmp.eq.s32.totalorder %s12, 1
    %p30 = por %p28, %p29
    %p31 = scmp.ne.s32.totalorder %s20, %s21
    %p32 = scmp.eq.s32.totalorder %s12, 0
    %p33 = por %p31, %p32
    %p34 = scmp.ne.s32.totalorder %s20, %s21
    %p35 = scmp.eq.s32.totalorder %s13, 1
    %p36 = por %p34, %p35
    %p38 = scmp.ne.s32.totalorder %s21, %s37
    %p39 = scmp.eq.s32.totalorder %s13, 0
    %p40 = por %p38, %p39
    %s41 = ssub.s32 %s7, %s14
    %p42 = scmp.eq.s32.totalorder %s41, 0
    %s44 = sadd.s32 %s43, 1
    %s45 = scalar_select %p42, %s43, %s44
    %p48 = pneg %p42
    %p49 = scmp.eq.s32.totalorder %s7, 1
    %p50 = por %p48, %p49
    %p51 = scmp.ne.s32.totalorder %s43, %s46
    %p52 = scmp.eq.s32.totalorder %s7, 0
    %p53 = por %p51, %p52
    %p54 = scmp.ne.s32.totalorder %s43, %s46
    %p55 = scmp.eq.s32.totalorder %s12, 1
    %p56 = por %p54, %p55
    %p57 = scmp.ne.s32.totalorder %s46, %s47
    %p58 = scmp.eq.s32.totalorder %s12, 0
    %p59 = por %p57, %p58
    %p60 = scmp.ne.s32.totalorder %s46, %s47
    %p61 = scmp.eq.s32.totalorder %s13, 1
    %p62 = por %p60, %p61
    %p64 = scmp.ne.s32.totalorder %s47, %s63
    %p65 = scmp.eq.s32.totalorder %s13, 0
    %p66 = por %p64, %p65
    %p67 = scmp.le.s32.totalorder 1, %s7
    %p68 = scmp.lt.s32.totalorder %s7, 3
    %p69 = pnand %p67, %p68
    %p70 = pneg %p69
    // Predicated region
    $region9: #{oafilter_forward.4} parent=5 // pred_check
      _
    $region10: #{oafilter_forward.4} parent=5 // pred_check_branch
      %72 = sbr.rel (%p69) target = $region12
    $region11: #{oafilter_forward.4} parent=5 // pred_region
      %s73 = ssub.s32 %s7, 1
    $region12: #{oafilter_forward.4} parent=5 // pred_fallthru
      _
    %p74 = scmp.lt.s32.totalorder %s7, 2
    // Predicated region
    $region13: #{oafilter_forward.4} parent=5 // pred_check
      %p75 = pneg %p74
    $region14: #{oafilter_forward.4} parent=5 // pred_check_branch
      %77 = sbr.rel (%p75) target = $region16
    $region15: #{oafilter_forward.4} parent=5 // pred_region
      // Predicated region
      $region17: #{oafilter_forward.4} parent=15 // pred_check
        %p78 = pneg %p27
      $region18: #{oafilter_forward.4} parent=15 // pred_check_branch
        %80 = sbr.rel (%p78) target = $region20
      $region19: #{oafilter_forward.4} parent=15 // pred_region
        %p81 = scmp.lt.s32.totalorder %s7, 1
        %s82 = scalar_select %p81, %s7, 1
        %s83 = smul.addr %s82, 8
        %s84 = scalar_lea.vmem %s0, %s83
      $region20: #{oafilter_forward.4} parent=15 // pred_fallthru
        _
    $region16: #{oafilter_forward.4} parent=5 // pred_fallthru
      _
    %p85 = scmp.le.s32.totalorder 1, %s7
    %p86 = scmp.lt.s32.totalorder %s7, 3
    %p87 = pnand %p85, %p86
    %p88 = pneg %p87
    // Predicated region
    $region21: #{oafilter_forward.4} parent=5 // pred_check
      _
    $region22: #{oafilter_forward.4} parent=5 // pred_check_branch
      %90 = sbr.rel (%p87) target = $region24
    $region23: #{oafilter_forward.4} parent=5 // pred_region
      %s91 = ssub.s32 %s7, 1
      %p92 = scmp.lt.s32.totalorder %s12, 1
      %s93 = scalar_select %p92, %s12, 1
      %s94 = smul.addr %s93, 8
      %s95 = scalar_lea.vmem %s0, %s94
      %p96 = pneg %p33
      %p97 = pneg %p30
      %p98 = pneg %p59
      %p99 = pneg %p56
      %p100 = scmp.lt.s32.totalorder %s12, 1
      %s101 = scalar_select %p100, %s12, 1
      %s102 = smul.addr %s101, 8
      %s103 = scalar_lea.vmem %s1, %s102
      %p104 = scmp.lt.s32.totalorder %s12, 1
      %s105 = scalar_select %p104, %s12, 1
      %s106 = smul.addr %s105, 8
      %s107 = scalar_lea.vmem %s0, %s106
      %p108 = scmp.lt.s32.totalorder %s12, 1
      %s109 = scalar_select %p108, %s12, 1
      %s110 = smul.addr %s109, 8
      %s111 = scalar_lea.vmem %s1, %s110
      %v112 = vld [vmem:[%s107] sm:$0xff]
      %113 = vadd.xlane.f32.xlu0 %v112
      %v114 = vpop.xlane.xlu0 %113
      %v115 = vmul.f32 %v114, 0.0625
      %v116 = vmul.f32 %v112, %v112
      %117 = vadd.xlane.f32.xlu0 %v116
      %v118 = vpop.xlane.xlu0 %117
      %v119 = vmul.f32 %v118, 0.0625
      %v120 = vmul.f32 %v115, %v115
      %v121 = vsub.f32 %v119, %v120
      %v122 = vmax.f32 %v121, 0.0
      %vm123 = vcmask 7168
      %124 = vst.msk [vmem:[%s111] sm:$0xff] %vm123, %v115
      %vm125 = vcmask 15368
      %126 = vst.msk [vmem:[%s111] sm:$0xff] %vm125, %v122
      %p127 = scmp.lt.s32.totalorder %s12, 1
      %s128 = scalar_select %p127, %s12, 1
      %s129 = smul.addr %s128, 8
      %s130 = scalar_lea.vmem %s1, %s129
      // Predicated region
      $region25: #{oafilter_forward.4} parent=23 // pred_check
        %p131 = pneg %p56
      $region26: #{oafilter_forward.4} parent=23 // pred_check_branch
        %133 = sbr.rel (%p131) target = $region28
      $region27: #{oafilter_forward.4} parent=23 // pred_region
        _
      $region28: #{oafilter_forward.4} parent=23 // pred_fallthru
        _
    $region24: #{oafilter_forward.4} parent=5 // pred_fallthru
      _
    %p134 = scmp.le.s32.totalorder 2, %s7
    // Predicated region
    $region29: #{oafilter_forward.4} parent=5 // pred_check
      %p135 = pneg %p134
    $region30: #{oafilter_forward.4} parent=5 // pred_check_branch
      %137 = sbr.rel (%p135) target = $region32
    $region31: #{oafilter_forward.4} parent=5 // pred_region
      %s138 = ssub.s32 %s7, 2
      // Predicated region
      $region33: #{oafilter_forward.4} parent=31 // pred_check
        %p139 = pneg %p62
      $region34: #{oafilter_forward.4} parent=31 // pred_check_branch
        %141 = sbr.rel (%p139) target = $region36
      $region35: #{oafilter_forward.4} parent=31 // pred_region
        %p142 = scmp.lt.s32.totalorder %s13, 1
        %s143 = scalar_select %p142, %s13, 1
        %s144 = smul.addr %s143, 8
        %s145 = scalar_lea.vmem %s1, %s144
      $region36: #{oafilter_forward.4} parent=31 // pred_fallthru
        _
    $region32: #{oafilter_forward.4} parent=5 // pred_fallthru
      _
  $region6: #{oafilter_forward.4} parent=0 // loop_footer
    %s11 = sadd.s32 1, %s7
  $region7: #{oafilter_forward.4} parent=0 // loop_footer_branch
    %6 = sbr.rel target = $region3
  $region8: #{oafilter_forward.4} parent=0 // loop_exit
    _

// kernel: oafilter_forward.5
$region0: #{oafilter_forward.5}
  #allocation0 [shape = 'u32[]', space=smem, size = 0x4, offset = 0x4, fixed_abs, tag = 'smem constant byte address 0x4 - core index']
  #allocation1 [shape = 'u32[72,128]{1,0:T(1,128)}', space=vmem, size = 0x9000, scoped, tag = 'internal scratch']
  %s0 = inlined_call_operand.vmem [shape: f32[2,8,128], index: 0, kind: input, shape index: {}]
  %s1 = inlined_call_operand.vmem [shape: f32[2,8,1], index: 1, kind: input, shape index: {}]
  %s2 = inlined_call_operand.vmem [shape: f32[2,8,1], index: 2, kind: input, shape index: {}]
  %s3 = inlined_call_operand.vmem [shape: f32[1,128], index: 3, kind: input, shape index: {}]
  %s4 = inlined_call_operand.vmem [shape: bf16[8,8], index: 4, kind: input, shape index: {}]
  %s5 = inlined_call_operand.vmem [shape: f32[8,1], index: 5, kind: input, shape index: {}]
  %s6 = inlined_call_operand.vmem [shape: bf16[2,8,128], index: 6, kind: output, shape index: {0}]
  %s7 = inlined_call_operand.vmem [shape: f32[2,2,128], index: 7, kind: output, shape index: {1}]
  %8 = xla_tuple %s6, %s7
  %s9 = sld [smem:[#allocation0]]
  $region65: #{oafilter_forward.5} parent=0
    _
  %s11 = ssub.s32 1, %s9
  %s12 = scalar_select 0, %s11, %s9
  loop: start=0, step=1, limit=4
  $region2: #{oafilter_forward.5} parent=0 // loop_pre_header
    _
  $region3: #{oafilter_forward.5} parent=0 // loop_header
    %s14 = sphi 0, %s18
    %p15 = scmp.ge.s32.totalorder %s14, 4
    %s24 = sphi 0, %s26
    %s27 = sphi 0, %s24
    %s28 = sphi 0, %s27
    %s44 = sphi 0, %s28
    %s50 = sphi 0, %s52
    %s53 = sphi 0, %s50
    %s54 = sphi 0, %s53
    %s70 = sphi 0, %s54
    %s76 = sphi 0, %s78
    %s79 = sphi 0, %s76
    %s80 = sphi 0, %s79
    %s96 = sphi 0, %s80
    %s100 = sphi 0, %s100
    %s102 = sphi 0, %s100
    %s103 = sphi 0, %s102
    %s117 = sphi 0, %s103
    %s121 = sphi 0, %s121
    %s123 = sphi 0, %s121
    %s124 = sphi 0, %s123
    %s138 = sphi 0, %s124
    %s142 = sphi 0, %s142
    %s144 = sphi 0, %s142
    %s145 = sphi 0, %s144
    %s159 = sphi 0, %s145
    %s165 = sphi 0, %s167
    %s168 = sphi 0, %s165
    %s169 = sphi 0, %s168
    %s185 = sphi 0, %s169
    %s191 = sphi 0, %s193
    %s194 = sphi 0, %s191
    %s195 = sphi 0, %s194
    %s211 = sphi 0, %s195
  $region4: #{oafilter_forward.5} parent=0 // loop_header_branch
    %17 = sbr.rel (%p15) target = $region8
  $region5: #{oafilter_forward.5} parent=0 // loop_body
    %s19 = ssub.s32 %s14, 1
    %s20 = ssub.s32 %s14, 2
    %s21 = sadd.s32 %s14, 1
    %s22 = ssub.s32 %s14, %s21
    %p23 = scmp.eq.s32.totalorder %s22, 0
    %s25 = sadd.s32 %s24, 1
    %s26 = scalar_select %p23, %s24, %s25
    %p29 = pneg %p23
    %p30 = scmp.eq.s32.totalorder %s14, 1
    %p31 = por %p29, %p30
    %p32 = scmp.ne.s32.totalorder %s24, %s27
    %p33 = scmp.eq.s32.totalorder %s14, 0
    %p34 = por %p32, %p33
    %p35 = scmp.ne.s32.totalorder %s24, %s27
    %p36 = scmp.eq.s32.totalorder %s19, 1
    %p37 = por %p35, %p36
    %p38 = scmp.ne.s32.totalorder %s27, %s28
    %p39 = scmp.eq.s32.totalorder %s19, 0
    %p40 = por %p38, %p39
    %p41 = scmp.ne.s32.totalorder %s27, %s28
    %p42 = scmp.eq.s32.totalorder %s20, 1
    %p43 = por %p41, %p42
    %p45 = scmp.ne.s32.totalorder %s28, %s44
    %p46 = scmp.eq.s32.totalorder %s20, 0
    %p47 = por %p45, %p46
    %s48 = ssub.s32 %s14, %s21
    %p49 = scmp.eq.s32.totalorder %s48, 0
    %s51 = sadd.s32 %s50, 1
    %s52 = scalar_select %p49, %s50, %s51
    %p55 = pneg %p49
    %p56 = scmp.eq.s32.totalorder %s14, 1
    %p57 = por %p55, %p56
    %p58 = scmp.ne.s32.totalorder %s50, %s53
    %p59 = scmp.eq.s32.totalorder %s14, 0
    %p60 = por %p58, %p59
    %p61 = scmp.ne.s32.totalorder %s50, %s53
    %p62 = scmp.eq.s32.totalorder %s19, 1
    %p63 = por %p61, %p62
    %p64 = scmp.ne.s32.totalorder %s53, %s54
    %p65 = scmp.eq.s32.totalorder %s19, 0
    %p66 = por %p64, %p65
    %p67 = scmp.ne.s32.totalorder %s53, %s54
    %p68 = scmp.eq.s32.totalorder %s20, 1
    %p69 = por %p67, %p68
    %p71 = scmp.ne.s32.totalorder %s54, %s70
    %p72 = scmp.eq.s32.totalorder %s20, 0
    %p73 = por %p71, %p72
    %s74 = ssub.s32 %s14, %s21
    %p75 = scmp.eq.s32.totalorder %s74, 0
    %s77 = sadd.s32 %s76, 1
    %s78 = scalar_select %p75, %s76, %s77
    %p81 = pneg %p75
    %p82 = scmp.eq.s32.totalorder %s14, 1
    %p83 = por %p81, %p82
    %p84 = scmp.ne.s32.totalorder %s76, %s79
    %p85 = scmp.eq.s32.totalorder %s14, 0
    %p86 = por %p84, %p85
    %p87 = scmp.ne.s32.totalorder %s76, %s79
    %p88 = scmp.eq.s32.totalorder %s19, 1
    %p89 = por %p87, %p88
    %p90 = scmp.ne.s32.totalorder %s79, %s80
    %p91 = scmp.eq.s32.totalorder %s19, 0
    %p92 = por %p90, %p91
    %p93 = scmp.ne.s32.totalorder %s79, %s80
    %p94 = scmp.eq.s32.totalorder %s20, 1
    %p95 = por %p93, %p94
    %p97 = scmp.ne.s32.totalorder %s80, %s96
    %p98 = scmp.eq.s32.totalorder %s20, 0
    %p99 = por %p97, %p98
    %s101 = sadd.s32 %s100, 1
    %p104 = scmp.eq.s32.totalorder %s14, 1
    %p105 = scmp.ne.s32.totalorder %s100, %s102
    %p106 = scmp.eq.s32.totalorder %s14, 0
    %p107 = por %p105, %p106
    %p108 = scmp.ne.s32.totalorder %s100, %s102
    %p109 = scmp.eq.s32.totalorder %s19, 1
    %p110 = por %p108, %p109
    %p111 = scmp.ne.s32.totalorder %s102, %s103
    %p112 = scmp.eq.s32.totalorder %s19, 0
    %p113 = por %p111, %p112
    %p114 = scmp.ne.s32.totalorder %s102, %s103
    %p115 = scmp.eq.s32.totalorder %s20, 1
    %p116 = por %p114, %p115
    %p118 = scmp.ne.s32.totalorder %s103, %s117
    %p119 = scmp.eq.s32.totalorder %s20, 0
    %p120 = por %p118, %p119
    %s122 = sadd.s32 %s121, 1
    %p125 = scmp.eq.s32.totalorder %s14, 1
    %p126 = scmp.ne.s32.totalorder %s121, %s123
    %p127 = scmp.eq.s32.totalorder %s14, 0
    %p128 = por %p126, %p127
    %p129 = scmp.ne.s32.totalorder %s121, %s123
    %p130 = scmp.eq.s32.totalorder %s19, 1
    %p131 = por %p129, %p130
    %p132 = scmp.ne.s32.totalorder %s123, %s124
    %p133 = scmp.eq.s32.totalorder %s19, 0
    %p134 = por %p132, %p133
    %p135 = scmp.ne.s32.totalorder %s123, %s124
    %p136 = scmp.eq.s32.totalorder %s20, 1
    %p137 = por %p135, %p136
    %p139 = scmp.ne.s32.totalorder %s124, %s138
    %p140 = scmp.eq.s32.totalorder %s20, 0
    %p141 = por %p139, %p140
    %s143 = sadd.s32 %s142, 1
    %p146 = scmp.eq.s32.totalorder %s14, 1
    %p147 = scmp.ne.s32.totalorder %s142, %s144
    %p148 = scmp.eq.s32.totalorder %s14, 0
    %p149 = por %p147, %p148
    %p150 = scmp.ne.s32.totalorder %s142, %s144
    %p151 = scmp.eq.s32.totalorder %s19, 1
    %p152 = por %p150, %p151
    %p153 = scmp.ne.s32.totalorder %s144, %s145
    %p154 = scmp.eq.s32.totalorder %s19, 0
    %p155 = por %p153, %p154
    %p156 = scmp.ne.s32.totalorder %s144, %s145
    %p157 = scmp.eq.s32.totalorder %s20, 1
    %p158 = por %p156, %p157
    %p160 = scmp.ne.s32.totalorder %s145, %s159
    %p161 = scmp.eq.s32.totalorder %s20, 0
    %p162 = por %p160, %p161
    %s163 = ssub.s32 %s14, %s21
    %p164 = scmp.eq.s32.totalorder %s163, 0
    %s166 = sadd.s32 %s165, 1
    %s167 = scalar_select %p164, %s165, %s166
    %p170 = pneg %p164
    %p171 = scmp.eq.s32.totalorder %s14, 1
    %p172 = por %p170, %p171
    %p173 = scmp.ne.s32.totalorder %s165, %s168
    %p174 = scmp.eq.s32.totalorder %s14, 0
    %p175 = por %p173, %p174
    %p176 = scmp.ne.s32.totalorder %s165, %s168
    %p177 = scmp.eq.s32.totalorder %s19, 1
    %p178 = por %p176, %p177
    %p179 = scmp.ne.s32.totalorder %s168, %s169
    %p180 = scmp.eq.s32.totalorder %s19, 0
    %p181 = por %p179, %p180
    %p182 = scmp.ne.s32.totalorder %s168, %s169
    %p183 = scmp.eq.s32.totalorder %s20, 1
    %p184 = por %p182, %p183
    %p186 = scmp.ne.s32.totalorder %s169, %s185
    %p187 = scmp.eq.s32.totalorder %s20, 0
    %p188 = por %p186, %p187
    %s189 = ssub.s32 %s14, %s21
    %p190 = scmp.eq.s32.totalorder %s189, 0
    %s192 = sadd.s32 %s191, 1
    %s193 = scalar_select %p190, %s191, %s192
    %p196 = pneg %p190
    %p197 = scmp.eq.s32.totalorder %s14, 1
    %p198 = por %p196, %p197
    %p199 = scmp.ne.s32.totalorder %s191, %s194
    %p200 = scmp.eq.s32.totalorder %s14, 0
    %p201 = por %p199, %p200
    %p202 = scmp.ne.s32.totalorder %s191, %s194
    %p203 = scmp.eq.s32.totalorder %s19, 1
    %p204 = por %p202, %p203
    %p205 = scmp.ne.s32.totalorder %s194, %s195
    %p206 = scmp.eq.s32.totalorder %s19, 0
    %p207 = por %p205, %p206
    %p208 = scmp.ne.s32.totalorder %s194, %s195
    %p209 = scmp.eq.s32.totalorder %s20, 1
    %p210 = por %p208, %p209
    %p212 = scmp.ne.s32.totalorder %s195, %s211
    %p213 = scmp.eq.s32.totalorder %s20, 0
    %p214 = por %p212, %p213
    %p215 = scmp.le.s32.totalorder 1, %s14
    %p216 = scmp.lt.s32.totalorder %s14, 3
    %p217 = pnand %p215, %p216
    %p218 = pneg %p217
    // Predicated region
    $region9: #{oafilter_forward.5} parent=5 // pred_check
      _
    $region10: #{oafilter_forward.5} parent=5 // pred_check_branch
      %220 = sbr.rel (%p217) target = $region12
    $region11: #{oafilter_forward.5} parent=5 // pred_region
      %s221 = ssub.s32 %s14, 1
      // Predicated region
      $region13: #{oafilter_forward.5} parent=11 // pred_check
        %p222 = pneg %p113
      $region14: #{oafilter_forward.5} parent=11 // pred_check_branch
        %224 = sbr.rel (%p222) target = $region16
      $region15: #{oafilter_forward.5} parent=11 // pred_region
        _
      $region16: #{oafilter_forward.5} parent=11 // pred_fallthru
        _
      // Predicated region
      $region17: #{oafilter_forward.5} parent=11 // pred_check
        %p225 = pneg %p134
      $region18: #{oafilter_forward.5} parent=11 // pred_check_branch
        %227 = sbr.rel (%p225) target = $region20
      $region19: #{oafilter_forward.5} parent=11 // pred_region
        _
      $region20: #{oafilter_forward.5} parent=11 // pred_fallthru
        _
      // Predicated region
      $region21: #{oafilter_forward.5} parent=11 // pred_check
        %p228 = pneg %p155
      $region22: #{oafilter_forward.5} parent=11 // pred_check_branch
        %230 = sbr.rel (%p228) target = $region24
      $region23: #{oafilter_forward.5} parent=11 // pred_region
        _
      $region24: #{oafilter_forward.5} parent=11 // pred_fallthru
        _
    $region12: #{oafilter_forward.5} parent=5 // pred_fallthru
      _
    %p231 = scmp.lt.s32.totalorder %s14, 2
    // Predicated region
    $region25: #{oafilter_forward.5} parent=5 // pred_check
      %p232 = pneg %p231
    $region26: #{oafilter_forward.5} parent=5 // pred_check_branch
      %234 = sbr.rel (%p232) target = $region28
    $region27: #{oafilter_forward.5} parent=5 // pred_region
      // Predicated region
      $region29: #{oafilter_forward.5} parent=27 // pred_check
        %p235 = pneg %p34
      $region30: #{oafilter_forward.5} parent=27 // pred_check_branch
        %237 = sbr.rel (%p235) target = $region32
      $region31: #{oafilter_forward.5} parent=27 // pred_region
        %p238 = scmp.lt.s32.totalorder %s14, 1
        %s239 = scalar_select %p238, %s14, 1
        %s240 = smul.addr %s239, 8
        %s241 = scalar_lea.vmem %s0, %s240
      $region32: #{oafilter_forward.5} parent=27 // pred_fallthru
        _
      // Predicated region
      $region33: #{oafilter_forward.5} parent=27 // pred_check
        %p242 = pneg %p60
      $region34: #{oafilter_forward.5} parent=27 // pred_check_branch
        %244 = sbr.rel (%p242) target = $region36
      $region35: #{oafilter_forward.5} parent=27 // pred_region
        %p245 = scmp.lt.s32.totalorder %s14, 1
        %s246 = scalar_select %p245, %s14, 1
        %s247 = smul.addr %s246, 8
        %s248 = scalar_lea.vmem %s1, %s247
      $region36: #{oafilter_forward.5} parent=27 // pred_fallthru
        _
      // Predicated region
      $region37: #{oafilter_forward.5} parent=27 // pred_check
        %p249 = pneg %p86
      $region38: #{oafilter_forward.5} parent=27 // pred_check_branch
        %251 = sbr.rel (%p249) target = $region40
      $region39: #{oafilter_forward.5} parent=27 // pred_region
        %p252 = scmp.lt.s32.totalorder %s14, 1
        %s253 = scalar_select %p252, %s14, 1
        %s254 = smul.addr %s253, 8
        %s255 = scalar_lea.vmem %s2, %s254
      $region40: #{oafilter_forward.5} parent=27 // pred_fallthru
        _
    $region28: #{oafilter_forward.5} parent=5 // pred_fallthru
      _
    %p256 = scmp.le.s32.totalorder 1, %s14
    %p257 = scmp.lt.s32.totalorder %s14, 3
    %p258 = pnand %p256, %p257
    %p259 = pneg %p258
    // Predicated region
    $region41: #{oafilter_forward.5} parent=5 // pred_check
      _
    $region42: #{oafilter_forward.5} parent=5 // pred_check_branch
      %261 = sbr.rel (%p258) target = $region44
    $region43: #{oafilter_forward.5} parent=5 // pred_region
      %s262 = ssub.s32 %s14, 1
      %p263 = scmp.lt.s32.totalorder %s19, 1
      %s264 = scalar_select %p263, %s19, 1
      %s265 = smul.addr %s264, 8
      %s266 = scalar_lea.vmem %s0, %s265
      %p267 = pneg %p40
      %p268 = pneg %p37
      %p269 = scmp.lt.s32.totalorder %s19, 1
      %s270 = scalar_select %p269, %s19, 1
      %s271 = smul.addr %s270, 8
      %s272 = scalar_lea.vmem %s1, %s271
      %p273 = pneg %p66
      %p274 = pneg %p63
      %p275 = scmp.lt.s32.totalorder %s19, 1
      %s276 = scalar_select %p275, %s19, 1
      %s277 = smul.addr %s276, 8
      %s278 = scalar_lea.vmem %s2, %s277
      %p279 = pneg %p92
      %p280 = pneg %p89
      %p281 = pneg %p113
      %p282 = pneg %p110
      %p283 = pneg %p134
      %p284 = pneg %p131
      %p285 = pneg %p155
      %p286 = pneg %p152
      %p287 = pneg %p181
      %p288 = pneg %p178
      %p289 = scmp.lt.s32.totalorder %s19, 1
      %s290 = scalar_select %p289, %s19, 1
      %s291 = smul.addr %s290, 4
      %s292 = scalar_lea.vmem %s6, %s291
      %p293 = pneg %p207
      %p294 = pneg %p204
      %p295 = scmp.lt.s32.totalorder %s19, 1
      %s296 = scalar_select %p295, %s19, 1
      %s297 = smul.addr %s296, 2
      %s298 = scalar_lea.vmem %s7, %s297
      %p299 = scmp.lt.s32.totalorder %s19, 1
      %s300 = scalar_select %p299, %s19, 1
      %s301 = smul.addr %s300, 8
      %s302 = scalar_lea.vmem %s0, %s301
      %p303 = scmp.lt.s32.totalorder %s19, 1
      %s304 = scalar_select %p303, %s19, 1
      %s305 = smul.addr %s304, 8
      %s306 = scalar_lea.vmem %s1, %s305
      %p307 = scmp.lt.s32.totalorder %s19, 1
      %s308 = scalar_select %p307, %s19, 1
      %s309 = smul.addr %s308, 8
      %s310 = scalar_lea.vmem %s2, %s309
      %p311 = scmp.lt.s32.totalorder %s19, 1
      %s312 = scalar_select %p311, %s19, 1
      %s313 = smul.addr %s312, 4
      %s314 = scalar_lea.vmem %s6, %s313
      %p315 = scmp.lt.s32.totalorder %s19, 1
      %s316 = scalar_select %p315, %s19, 1
      %s317 = smul.addr %s316, 2
      %s318 = scalar_lea.vmem %s7, %s317
      %v320 = vld [vmem:[%s3] sm:$0x1]
      %v321 = vld [vmem:[%s4] sm:$0xf]
      %v322 = vld [vmem:[%s5] sm:$0xff]
      %v323 = vld [vmem:[%s302] sm:$0xff]
      %v324 = vld [vmem:[%s306] sm:$0xff]
      %326 = vset.pattern.permute.xlu0 0
      %327 = vperm.xlu0 %326, %v324
      %v328 = vpop.permute.xlu0 %327
      %v330 = vmul.f32 %v323, %v328
      %v331 = vld [vmem:[%s310] sm:$0xff]
      %333 = vset.pattern.permute.xlu0 0
      %334 = vperm.xlu0 %333, %v331
      %v335 = vpop.permute.xlu0 %334
      %v337 = vadd.f32 %v330, %v335
      %v338 = vmax.f32 %v337, 0.0
      %v339 = vpack.c.bf16 %v338, %v338
      %341 = vset.pattern.permute.xlu0 0
      %342 = vperm.xlu0 %341, %v322
      %v343 = vpop.permute.xlu0 %342
      %vm345 = vcmask 64512
      %v347 = vsel %vm345, %v321, 0
      %vm349 = vcmask 1043456
      %v351 = vsel %vm349, %v339, 0
      %353 = vmatpush.bf16.msra.mxu0 0
      %354 = vmatpush.bf16.msra.mxu0 0
      %355 = vmatpush.bf16.msra.mxu0 0
      %356 = vmatpush.bf16.msra.mxu0 0
      %357 = vmatpush.bf16.msra.mxu0 0
      %358 = vmatpush.bf16.msra.mxu0 0
      %359 = vmatpush.bf16.msra.mxu0 0
      %360 = vmatpush.bf16.msra.mxu0 %v351
      %361 = vmatmul.bf16.gmra.mxu0 %v347
      %v362 = vpop.f32.mrf.mxu0
      %v363 = vadd.f32 %v343, %v362
      %v364 = vpop.f32.mrf.mxu0
      %365 = vdwg.mxu0
      %v367 = vperm.slane %v320, 0
      %v369 = vmul.f32 %v363, %v367
      %v370 = vpack.c.bf16 %v369, %v369
      %371 = vst [vmem:[%s314] sm:$0xf] %v370
      %v372 = vrot.slane %v369, 4
      %v373 = vadd.f32 %v369, %v372
      %v374 = vrot.slane %v373, 2
      %v375 = vadd.f32 %v373, %v374
      %v376 = vrot.slane %v375, 1
      %v377 = vadd.f32 %v375, %v376
      %v378 = vadd.f32 %v377, 0.0
      %v379 = vmul.f32 %v369, %v369
      %v380 = vrot.slane %v379, 4
      %v381 = vadd.f32 %v379, %v380
      %v382 = vrot.slane %v381, 2
      %v383 = vadd.f32 %v381, %v382
      %v384 = vrot.slane %v383, 1
      %v385 = vadd.f32 %v383, %v384
      %v386 = vadd.f32 %v385, 0.0
      %387 = vst [vmem:[%s318] sm:$0x1] %v378
      %388 = vst [vmem:[%s318 + $0x1] sm:$0x1] %v386
      %p389 = scmp.lt.s32.totalorder %s19, 1
      %s390 = scalar_select %p389, %s19, 1
      %s391 = smul.addr %s390, 4
      %s392 = scalar_lea.vmem %s6, %s391
      %p393 = scmp.lt.s32.totalorder %s19, 1
      %s394 = scalar_select %p393, %s19, 1
      %s395 = smul.addr %s394, 2
      %s396 = scalar_lea.vmem %s7, %s395
      // Predicated region
      $region45: #{oafilter_forward.5} parent=43 // pred_check
        %p397 = pneg %p178
      $region46: #{oafilter_forward.5} parent=43 // pred_check_branch
        %399 = sbr.rel (%p397) target = $region48
      $region47: #{oafilter_forward.5} parent=43 // pred_region
        _
      $region48: #{oafilter_forward.5} parent=43 // pred_fallthru
        _
      // Predicated region
      $region49: #{oafilter_forward.5} parent=43 // pred_check
        %p400 = pneg %p204
      $region50: #{oafilter_forward.5} parent=43 // pred_check_branch
        %402 = sbr.rel (%p400) target = $region52
      $region51: #{oafilter_forward.5} parent=43 // pred_region
        _
      $region52: #{oafilter_forward.5} parent=43 // pred_fallthru
        _
    $region44: #{oafilter_forward.5} parent=5 // pred_fallthru
      _
    %p403 = scmp.le.s32.totalorder 2, %s14
    // Predicated region
    $region53: #{oafilter_forward.5} parent=5 // pred_check
      %p404 = pneg %p403
    $region54: #{oafilter_forward.5} parent=5 // pred_check_branch
      %406 = sbr.rel (%p404) target = $region56
    $region55: #{oafilter_forward.5} parent=5 // pred_region
      %s407 = ssub.s32 %s14, 2
      // Predicated region
      $region57: #{oafilter_forward.5} parent=55 // pred_check
        %p408 = pneg %p184
      $region58: #{oafilter_forward.5} parent=55 // pred_check_branch
        %410 = sbr.rel (%p408) target = $region60
      $region59: #{oafilter_forward.5} parent=55 // pred_region
        %p411 = scmp.lt.s32.totalorder %s20, 1
        %s412 = scalar_select %p411, %s20, 1
        %s413 = smul.addr %s412, 4
        %s414 = scalar_lea.vmem %s6, %s413
      $region60: #{oafilter_forward.5} parent=55 // pred_fallthru
        _
      // Predicated region
      $region61: #{oafilter_forward.5} parent=55 // pred_check
        %p415 = pneg %p210
      $region62: #{oafilter_forward.5} parent=55 // pred_check_branch
        %417 = sbr.rel (%p415) target = $region64
      $region63: #{oafilter_forward.5} parent=55 // pred_region
        %p418 = scmp.lt.s32.totalorder %s20, 1
        %s419 = scalar_select %p418, %s20, 1
        %s420 = smul.addr %s419, 2
        %s421 = scalar_lea.vmem %s7, %s420
      $region64: #{oafilter_forward.5} parent=55 // pred_fallthru
        _
    $region56: #{oafilter_forward.5} parent=5 // pred_fallthru
      _
  $region6: #{oafilter_forward.5} parent=0 // loop_footer
    %s18 = sadd.s32 1, %s14
  $region7: #{oafilter_forward.5} parent=0 // loop_footer_branch
    %13 = sbr.rel target = $region3
  $region8: #{oafilter_forward.5} parent=0 // loop_exit
    _

// kernel: oafilter_forward.6
$region0: #{oafilter_forward.6}
  #allocation0 [shape = 'u32[]', space=smem, size = 0x4, offset = 0x4, fixed_abs, tag = 'smem constant byte address 0x4 - core index']
  #allocation1 [shape = 'u32[72,128]{1,0:T(1,128)}', space=vmem, size = 0x9000, scoped, tag = 'internal scratch']
  %s0 = inlined_call_operand.vmem [shape: bf16[2,8,128], index: 0, kind: input, shape index: {}]
  %s1 = inlined_call_operand.vmem [shape: f32[1,128], index: 1, kind: input, shape index: {}]
  %s2 = inlined_call_operand.vmem [shape: f32[1,128], index: 2, kind: input, shape index: {}]
  %s3 = inlined_call_operand.vmem [shape: f32[1,128], index: 3, kind: input, shape index: {}]
  %s4 = inlined_call_operand.vmem [shape: bf16[128,128], index: 4, kind: input, shape index: {}]
  %s5 = inlined_call_operand.vmem [shape: f32[1,128], index: 5, kind: input, shape index: {}]
  %s6 = inlined_call_operand.vmem [shape: bf16[2,8,128], index: 6, kind: output, shape index: {0}]
  %s7 = inlined_call_operand.vmem [shape: f32[2,8,1], index: 7, kind: output, shape index: {1}]
  %8 = xla_tuple %s6, %s7
  %s9 = sld [smem:[#allocation0]]
  $region65: #{oafilter_forward.6} parent=0
    _
  %s11 = ssub.s32 1, %s9
  %s12 = scalar_select 0, %s11, %s9
  loop: start=0, step=1, limit=4
  $region2: #{oafilter_forward.6} parent=0 // loop_pre_header
    _
  $region3: #{oafilter_forward.6} parent=0 // loop_header
    %s14 = sphi 0, %s18
    %p15 = scmp.ge.s32.totalorder %s14, 4
    %s24 = sphi 0, %s26
    %s27 = sphi 0, %s24
    %s28 = sphi 0, %s27
    %s44 = sphi 0, %s28
    %s48 = sphi 0, %s48
    %s50 = sphi 0, %s48
    %s51 = sphi 0, %s50
    %s65 = sphi 0, %s51
    %s69 = sphi 0, %s69
    %s71 = sphi 0, %s69
    %s72 = sphi 0, %s71
    %s86 = sphi 0, %s72
    %s90 = sphi 0, %s90
    %s92 = sphi 0, %s90
    %s93 = sphi 0, %s92
    %s107 = sphi 0, %s93
    %s111 = sphi 0, %s111
    %s113 = sphi 0, %s111
    %s114 = sphi 0, %s113
    %s128 = sphi 0, %s114
    %s132 = sphi 0, %s132
    %s134 = sphi 0, %s132
    %s135 = sphi 0, %s134
    %s149 = sphi 0, %s135
    %s155 = sphi 0, %s157
    %s158 = sphi 0, %s155
    %s159 = sphi 0, %s158
    %s175 = sphi 0, %s159
    %s181 = sphi 0, %s183
    %s184 = sphi 0, %s181
    %s185 = sphi 0, %s184
    %s201 = sphi 0, %s185
  $region4: #{oafilter_forward.6} parent=0 // loop_header_branch
    %17 = sbr.rel (%p15) target = $region8
  $region5: #{oafilter_forward.6} parent=0 // loop_body
    %s19 = ssub.s32 %s14, 1
    %s20 = ssub.s32 %s14, 2
    %s21 = sadd.s32 %s14, 1
    %s22 = ssub.s32 %s14, %s21
    %p23 = scmp.eq.s32.totalorder %s22, 0
    %s25 = sadd.s32 %s24, 1
    %s26 = scalar_select %p23, %s24, %s25
    %p29 = pneg %p23
    %p30 = scmp.eq.s32.totalorder %s14, 1
    %p31 = por %p29, %p30
    %p32 = scmp.ne.s32.totalorder %s24, %s27
    %p33 = scmp.eq.s32.totalorder %s14, 0
    %p34 = por %p32, %p33
    %p35 = scmp.ne.s32.totalorder %s24, %s27
    %p36 = scmp.eq.s32.totalorder %s19, 1
    %p37 = por %p35, %p36
    %p38 = scmp.ne.s32.totalorder %s27, %s28
    %p39 = scmp.eq.s32.totalorder %s19, 0
    %p40 = por %p38, %p39
    %p41 = scmp.ne.s32.totalorder %s27, %s28
    %p42 = scmp.eq.s32.totalorder %s20, 1
    %p43 = por %p41, %p42
    %p45 = scmp.ne.s32.totalorder %s28, %s44
    %p46 = scmp.eq.s32.totalorder %s20, 0
    %p47 = por %p45, %p46
    %s49 = sadd.s32 %s48, 1
    %p52 = scmp.eq.s32.totalorder %s14, 1
    %p53 = scmp.ne.s32.totalorder %s48, %s50
    %p54 = scmp.eq.s32.totalorder %s14, 0
    %p55 = por %p53, %p54
    %p56 = scmp.ne.s32.totalorder %s48, %s50
    %p57 = scmp.eq.s32.totalorder %s19, 1
    %p58 = por %p56, %p57
    %p59 = scmp.ne.s32.totalorder %s50, %s51
    %p60 = scmp.eq.s32.totalorder %s19, 0
    %p61 = por %p59, %p60
    %p62 = scmp.ne.s32.totalorder %s50, %s51
    %p63 = scmp.eq.s32.totalorder %s20, 1
    %p64 = por %p62, %p63
    %p66 = scmp.ne.s32.totalorder %s51, %s65
    %p67 = scmp.eq.s32.totalorder %s20, 0
    %p68 = por %p66, %p67
    %s70 = sadd.s32 %s69, 1
    %p73 = scmp.eq.s32.totalorder %s14, 1
    %p74 = scmp.ne.s32.totalorder %s69, %s71
    %p75 = scmp.eq.s32.totalorder %s14, 0
    %p76 = por %p74, %p75
    %p77 = scmp.ne.s32.totalorder %s69, %s71
    %p78 = scmp.eq.s32.totalorder %s19, 1
    %p79 = por %p77, %p78
    %p80 = scmp.ne.s32.totalorder %s71, %s72
    %p81 = scmp.eq.s32.totalorder %s19, 0
    %p82 = por %p80, %p81
    %p83 = scmp.ne.s32.totalorder %s71, %s72
    %p84 = scmp.eq.s32.totalorder %s20, 1
    %p85 = por %p83, %p84
    %p87 = scmp.ne.s32.totalorder %s72, %s86
    %p88 = scmp.eq.s32.totalorder %s20, 0
    %p89 = por %p87, %p88
    %s91 = sadd.s32 %s90, 1
    %p94 = scmp.eq.s32.totalorder %s14, 1
    %p95 = scmp.ne.s32.totalorder %s90, %s92
    %p96 = scmp.eq.s32.totalorder %s14, 0
    %p97 = por %p95, %p96
    %p98 = scmp.ne.s32.totalorder %s90, %s92
    %p99 = scmp.eq.s32.totalorder %s19, 1
    %p100 = por %p98, %p99
    %p101 = scmp.ne.s32.totalorder %s92, %s93
    %p102 = scmp.eq.s32.totalorder %s19, 0
    %p103 = por %p101, %p102
    %p104 = scmp.ne.s32.totalorder %s92, %s93
    %p105 = scmp.eq.s32.totalorder %s20, 1
    %p106 = por %p104, %p105
    %p108 = scmp.ne.s32.totalorder %s93, %s107
    %p109 = scmp.eq.s32.totalorder %s20, 0
    %p110 = por %p108, %p109
    %s112 = sadd.s32 %s111, 1
    %p115 = scmp.eq.s32.totalorder %s14, 1
    %p116 = scmp.ne.s32.totalorder %s111, %s113
    %p117 = scmp.eq.s32.totalorder %s14, 0
    %p118 = por %p116, %p117
    %p119 = scmp.ne.s32.totalorder %s111, %s113
    %p120 = scmp.eq.s32.totalorder %s19, 1
    %p121 = por %p119, %p120
    %p122 = scmp.ne.s32.totalorder %s113, %s114
    %p123 = scmp.eq.s32.totalorder %s19, 0
    %p124 = por %p122, %p123
    %p125 = scmp.ne.s32.totalorder %s113, %s114
    %p126 = scmp.eq.s32.totalorder %s20, 1
    %p127 = por %p125, %p126
    %p129 = scmp.ne.s32.totalorder %s114, %s128
    %p130 = scmp.eq.s32.totalorder %s20, 0
    %p131 = por %p129, %p130
    %s133 = sadd.s32 %s132, 1
    %p136 = scmp.eq.s32.totalorder %s14, 1
    %p137 = scmp.ne.s32.totalorder %s132, %s134
    %p138 = scmp.eq.s32.totalorder %s14, 0
    %p139 = por %p137, %p138
    %p140 = scmp.ne.s32.totalorder %s132, %s134
    %p141 = scmp.eq.s32.totalorder %s19, 1
    %p142 = por %p140, %p141
    %p143 = scmp.ne.s32.totalorder %s134, %s135
    %p144 = scmp.eq.s32.totalorder %s19, 0
    %p145 = por %p143, %p144
    %p146 = scmp.ne.s32.totalorder %s134, %s135
    %p147 = scmp.eq.s32.totalorder %s20, 1
    %p148 = por %p146, %p147
    %p150 = scmp.ne.s32.totalorder %s135, %s149
    %p151 = scmp.eq.s32.totalorder %s20, 0
    %p152 = por %p150, %p151
    %s153 = ssub.s32 %s14, %s21
    %p154 = scmp.eq.s32.totalorder %s153, 0
    %s156 = sadd.s32 %s155, 1
    %s157 = scalar_select %p154, %s155, %s156
    %p160 = pneg %p154
    %p161 = scmp.eq.s32.totalorder %s14, 1
    %p162 = por %p160, %p161
    %p163 = scmp.ne.s32.totalorder %s155, %s158
    %p164 = scmp.eq.s32.totalorder %s14, 0
    %p165 = por %p163, %p164
    %p166 = scmp.ne.s32.totalorder %s155, %s158
    %p167 = scmp.eq.s32.totalorder %s19, 1
    %p168 = por %p166, %p167
    %p169 = scmp.ne.s32.totalorder %s158, %s159
    %p170 = scmp.eq.s32.totalorder %s19, 0
    %p171 = por %p169, %p170
    %p172 = scmp.ne.s32.totalorder %s158, %s159
    %p173 = scmp.eq.s32.totalorder %s20, 1
    %p174 = por %p172, %p173
    %p176 = scmp.ne.s32.totalorder %s159, %s175
    %p177 = scmp.eq.s32.totalorder %s20, 0
    %p178 = por %p176, %p177
    %s179 = ssub.s32 %s14, %s21
    %p180 = scmp.eq.s32.totalorder %s179, 0
    %s182 = sadd.s32 %s181, 1
    %s183 = scalar_select %p180, %s181, %s182
    %p186 = pneg %p180
    %p187 = scmp.eq.s32.totalorder %s14, 1
    %p188 = por %p186, %p187
    %p189 = scmp.ne.s32.totalorder %s181, %s184
    %p190 = scmp.eq.s32.totalorder %s14, 0
    %p191 = por %p189, %p190
    %p192 = scmp.ne.s32.totalorder %s181, %s184
    %p193 = scmp.eq.s32.totalorder %s19, 1
    %p194 = por %p192, %p193
    %p195 = scmp.ne.s32.totalorder %s184, %s185
    %p196 = scmp.eq.s32.totalorder %s19, 0
    %p197 = por %p195, %p196
    %p198 = scmp.ne.s32.totalorder %s184, %s185
    %p199 = scmp.eq.s32.totalorder %s20, 1
    %p200 = por %p198, %p199
    %p202 = scmp.ne.s32.totalorder %s185, %s201
    %p203 = scmp.eq.s32.totalorder %s20, 0
    %p204 = por %p202, %p203
    %p205 = scmp.le.s32.totalorder 1, %s14
    %p206 = scmp.lt.s32.totalorder %s14, 3
    %p207 = pnand %p205, %p206
    %p208 = pneg %p207
    // Predicated region
    $region9: #{oafilter_forward.6} parent=5 // pred_check
      _
    $region10: #{oafilter_forward.6} parent=5 // pred_check_branch
      %210 = sbr.rel (%p207) target = $region12
    $region11: #{oafilter_forward.6} parent=5 // pred_region
      %s211 = ssub.s32 %s14, 1
      // Predicated region
      $region13: #{oafilter_forward.6} parent=11 // pred_check
        %p212 = pneg %p61
      $region14: #{oafilter_forward.6} parent=11 // pred_check_branch
        %214 = sbr.rel (%p212) target = $region16
      $region15: #{oafilter_forward.6} parent=11 // pred_region
        _
      $region16: #{oafilter_forward.6} parent=11 // pred_fallthru
        _
      // Predicated region
      $region17: #{oafilter_forward.6} parent=11 // pred_check
        %p215 = pneg %p82
      $region18: #{oafilter_forward.6} parent=11 // pred_check_branch
        %217 = sbr.rel (%p215) target = $region20
      $region19: #{oafilter_forward.6} parent=11 // pred_region
        _
      $region20: #{oafilter_forward.6} parent=11 // pred_fallthru
        _
      // Predicated region
      $region21: #{oafilter_forward.6} parent=11 // pred_check
        %p218 = pneg %p103
      $region22: #{oafilter_forward.6} parent=11 // pred_check_branch
        %220 = sbr.rel (%p218) target = $region24
      $region23: #{oafilter_forward.6} parent=11 // pred_region
        _
      $region24: #{oafilter_forward.6} parent=11 // pred_fallthru
        _
      // Predicated region
      $region25: #{oafilter_forward.6} parent=11 // pred_check
        %p221 = pneg %p124
      $region26: #{oafilter_forward.6} parent=11 // pred_check_branch
        %223 = sbr.rel (%p221) target = $region28
      $region27: #{oafilter_forward.6} parent=11 // pred_region
        _
      $region28: #{oafilter_forward.6} parent=11 // pred_fallthru
        _
      // Predicated region
      $region29: #{oafilter_forward.6} parent=11 // pred_check
        %p224 = pneg %p145
      $region30: #{oafilter_forward.6} parent=11 // pred_check_branch
        %226 = sbr.rel (%p224) target = $region32
      $region31: #{oafilter_forward.6} parent=11 // pred_region
        _
      $region32: #{oafilter_forward.6} parent=11 // pred_fallthru
        _
    $region12: #{oafilter_forward.6} parent=5 // pred_fallthru
      _
    %p227 = scmp.lt.s32.totalorder %s14, 2
    // Predicated region
    $region33: #{oafilter_forward.6} parent=5 // pred_check
      %p228 = pneg %p227
    $region34: #{oafilter_forward.6} parent=5 // pred_check_branch
      %230 = sbr.rel (%p228) target = $region36
    $region35: #{oafilter_forward.6} parent=5 // pred_region
      // Predicated region
      $region37: #{oafilter_forward.6} parent=35 // pred_check
        %p231 = pneg %p34
      $region38: #{oafilter_forward.6} parent=35 // pred_check_branch
        %233 = sbr.rel (%p231) target = $region40
      $region39: #{oafilter_forward.6} parent=35 // pred_region
        %p234 = scmp.lt.s32.totalorder %s14, 1
        %s235 = scalar_select %p234, %s14, 1
        %s236 = smul.addr %s235, 4
        %s237 = scalar_lea.vmem %s0, %s236
      $region40: #{oafilter_forward.6} parent=35 // pred_fallthru
        _
    $region36: #{oafilter_forward.6} parent=5 // pred_fallthru
      _
    %p238 = scmp.le.s32.totalorder 1, %s14
    %p239 = scmp.lt.s32.totalorder %s14, 3
    %p240 = pnand %p238, %p239
    %p241 = pneg %p240
    // Predicated region
    $region41: #{oafilter_forward.6} parent=5 // pred_check
      _
    $region42: #{oafilter_forward.6} parent=5 // pred_check_branch
      %243 = sbr.rel (%p240) target = $region44
    $region43: #{oafilter_forward.6} parent=5 // pred_region
      %s244 = ssub.s32 %s14, 1
      %p245 = scmp.lt.s32.totalorder %s19, 1
      %s246 = scalar_select %p245, %s19, 1
      %s247 = smul.addr %s246, 4
      %s248 = scalar_lea.vmem %s0, %s247
      %p249 = pneg %p40
      %p250 = pneg %p37
      %p251 = pneg %p61
      %p252 = pneg %p58
      %p253 = pneg %p82
      %p254 = pneg %p79
      %p255 = pneg %p103
      %p256 = pneg %p100
      %p257 = pneg %p124
      %p258 = pneg %p121
      %p259 = pneg %p145
      %p260 = pneg %p142
      %p261 = pneg %p171
      %p262 = pneg %p168
      %p263 = scmp.lt.s32.totalorder %s19, 1
      %s264 = scalar_select %p263, %s19, 1
      %s265 = smul.addr %s264, 4
      %s266 = scalar_lea.vmem %s6, %s265
      %p267 = pneg %p197
      %p268 = pneg %p194
      %p269 = scmp.lt.s32.totalorder %s19, 1
      %s270 = scalar_select %p269, %s19, 1
      %s271 = smul.addr %s270, 8
      %s272 = scalar_lea.vmem %s7, %s271
      %p273 = scmp.lt.s32.totalorder %s19, 1
      %s274 = scalar_select %p273, %s19, 1
      %s275 = smul.addr %s274, 4
      %s276 = scalar_lea.vmem %s0, %s275
      %p277 = scmp.lt.s32.totalorder %s19, 1
      %s278 = scalar_select %p277, %s19, 1
      %s279 = smul.addr %s278, 4
      %s280 = scalar_lea.vmem %s6, %s279
      %p281 = scmp.lt.s32.totalorder %s19, 1
      %s282 = scalar_select %p281, %s19, 1
      %s283 = smul.addr %s282, 8
      %s284 = scalar_lea.vmem %s7, %s283
      %v285 = vld [vmem:[%s276] sm:$0xf]
      %v286 = vunpack.c.l.bf16 %v285
      %v287 = vld [vmem:[%s1] sm:$0x1]
      %v289 = vperm.slane %v287, 0
      %v291 = vmul.f32 %v286, %v289
      %v292 = vld [vmem:[%s2] sm:$0x1]
      %v294 = vperm.slane %v292, 0
      %v296 = vadd.f32 %v291, %v294
      %v297 = vmax.f32 %v296, 0.0
      %v298 = vpack.c.bf16 %v297, %v297
      %v299 = vld [vmem:[%s4] sm:$0xf]
      %v300 = vld [vmem:[%s4 + $0x4] sm:$0xf]
      %v301 = vld [vmem:[%s4 + $0x8] sm:$0xf]
      %v302 = vld [vmem:[%s4 + $0xc] sm:$0xf]
      %v303 = vld [vmem:[%s4 + $0x10] sm:$0xf]
      %v304 = vld [vmem:[%s4 + $0x14] sm:$0xf]
      %v305 = vld [vmem:[%s4 + $0x18] sm:$0xf]
      %v306 = vld [vmem:[%s4 + $0x1c] sm:$0xf]
      %v307 = vld [vmem:[%s4 + $0x20] sm:$0xf]
      %v308 = vld [vmem:[%s4 + $0x24] sm:$0xf]
      %v309 = vld [vmem:[%s4 + $0x28] sm:$0xf]
      %v310 = vld [vmem:[%s4 + $0x2c] sm:$0xf]
      %v311 = vld [vmem:[%s4 + $0x30] sm:$0xf]
      %v312 = vld [vmem:[%s4 + $0x34] sm:$0xf]
      %v313 = vld [vmem:[%s4 + $0x38] sm:$0xf]
      %v314 = vld [vmem:[%s4 + $0x3c] sm:$0xf]
      %v331 = vunpack.c.l.b16 %v299
      %v332 = vunpack.c.l.b16 %v300
      %v333 = vunpack.c.l.b16 %v301
      %v334 = vunpack.c.l.b16 %v302
      %v335 = vunpack.c.l.b16 %v303
      %v336 = vunpack.c.l.b16 %v304
      %v337 = vunpack.c.l.b16 %v305
      %v338 = vunpack.c.l.b16 %v306
      %v339 = vunpack.c.l.b16 %v307
      %v340 = vunpack.c.l.b16 %v308
      %v341 = vunpack.c.l.b16 %v309
      %v342 = vunpack.c.l.b16 %v310
      %v343 = vunpack.c.l.b16 %v311
      %v344 = vunpack.c.l.b16 %v312
      %v345 = vunpack.c.l.b16 %v313
      %v346 = vunpack.c.l.b16 %v314
      %v347 = vpack.c.b16 %v332, %v331
      %v348 = vpack.c.b16 %v334, %v333
      %v349 = vpack.c.b16 %v336, %v335
      %v350 = vpack.c.b16 %v338, %v337
      %v351 = vpack.c.b16 %v340, %v339
      %v352 = vpack.c.b16 %v342, %v341
      %v353 = vpack.c.b16 %v344, %v343
      %v354 = vpack.c.b16 %v346, %v345
      %363 = vmatpush.bf16.msra.mxu0 %v354
      %364 = vmatpush.bf16.msra.mxu0 %v353
      %365 = vmatpush.bf16.msra.mxu0 %v352
      %366 = vmatpush.bf16.msra.mxu0 %v351
      %367 = vmatpush.bf16.msra.mxu0 %v350
      %368 = vmatpush.bf16.msra.mxu0 %v349
      %369 = vmatpush.bf16.msra.mxu0 %v348
      %370 = vmatpush.bf16.msra.mxu0 %v347
      %371 = vmatmul.bf16.gmra.mxu0 %v298
      %v372 = vpop.f32.mrf.mxu0
      %v373 = vadd.f32 0.0, %v372
      %v374 = vpop.f32.mrf.mxu0
      %375 = vdwg.mxu0
      %v376 = vadd.f32 %v286, %v373
      %v377 = vld [vmem:[%s5] sm:$0x1]
      %v379 = vperm.slane %v377, 0
      %v381 = vadd.f32 %v376, %v379
      %382 = vadd.xlane.f32.xlu0 %v381
      %v383 = vpop.xlane.xlu0 %382
      %v384 = vmul.f32 %v383, 0.0625
      %v385 = vmul.f32 %v381, %v381
      %386 = vadd.xlane.f32.xlu0 %v385
      %v387 = vpop.xlane.xlu0 %386
      %v388 = vmul.f32 %v387, 0.0625
      %v389 = vmul.f32 %v384, %v384
      %v390 = vsub.f32 %v388, %v389
      %v391 = vmax.f32 %v390, 0.0
      %v392 = vsub.f32 %v381, %v384
      %v393 = vadd.f32 %v391, 0.001
      %v394 = vrsqrt.pop %v393
      %v395 = vmul.f32 %v394, %v393
      %v396 = vmul.f32 %v395, %v394
      %v397 = vmul.f32 0.5, %v396
      %v398 = vsub.f32 1.5, %v397
      %v399 = vmul.f32 %v394, %v398
      %vm400 = vweird.f32 %v393
      %vm401 = vweird.f32 %v394
      %vm402 = vmor %vm400, %vm401
      %v403 = vsel %vm402, %v394, %v399
      %v404 = vmul.f32 %v392, %v403
      %v405 = vld [vmem:[%s3] sm:$0x1]
      %v407 = vperm.slane %v405, 0
      %v409 = vmul.f32 %v404, %v407
      %v410 = vpack.c.bf16 %v409, %v409
      %411 = vst [vmem:[%s280] sm:$0xf] %v410
      %vm412 = vcmask 7168
      %413 = vst.msk [vmem:[%s284] sm:$0xff] %vm412, %v391
      %p414 = scmp.lt.s32.totalorder %s19, 1
      %s415 = scalar_select %p414, %s19, 1
      %s416 = smul.addr %s415, 4
      %s417 = scalar_lea.vmem %s6, %s416
      %p418 = scmp.lt.s32.totalorder %s19, 1
      %s419 = scalar_select %p418, %s19, 1
      %s420 = smul.addr %s419, 8
      %s421 = scalar_lea.vmem %s7, %s420
      // Predicated region
      $region45: #{oafilter_forward.6} parent=43 // pred_check
        %p422 = pneg %p168
      $region46: #{oafilter_forward.6} parent=43 // pred_check_branch
        %424 = sbr.rel (%p422) target = $region48
      $region47: #{oafilter_forward.6} parent=43 // pred_region
        _
      $region48: #{oafilter_forward.6} parent=43 // pred_fallthru
        _
      // Predicated region
      $region49: #{oafilter_forward.6} parent=43 // pred_check
        %p425 = pneg %p194
      $region50: #{oafilter_forward.6} parent=43 // pred_check_branch
        %427 = sbr.rel (%p425) target = $region52
      $region51: #{oafilter_forward.6} parent=43 // pred_region
        _
      $region52: #{oafilter_forward.6} parent=43 // pred_fallthru
        _
    $region44: #{oafilter_forward.6} parent=5 // pred_fallthru
      _
    %p428 = scmp.le.s32.totalorder 2, %s14
    // Predicated region
    $region53: #{oafilter_forward.6} parent=5 // pred_check
      %p429 = pneg %p428
    $region54: #{oafilter_forward.6} parent=5 // pred_check_branch
      %431 = sbr.rel (%p429) target = $region56
    $region55: #{oafilter_forward.6} parent=5 // pred_region
      %s432 = ssub.s32 %s14, 2
      // Predicated region
      $region57: #{oafilter_forward.6} parent=55 // pred_check
        %p433 = pneg %p174
      $region58: #{oafilter_forward.6} parent=55 // pred_check_branch
        %435 = sbr.rel (%p433) target = $region60
      $region59: #{oafilter_forward.6} parent=55 // pred_region
        %p436 = scmp.lt.s32.totalorder %s20, 1
        %s437 = scalar_select %p436, %s20, 1
        %s438 = smul.addr %s437, 4
        %s439 = scalar_lea.vmem %s6, %s438
      $region60: #{oafilter_forward.6} parent=55 // pred_fallthru
        _
      // Predicated region
      $region61: #{oafilter_forward.6} parent=55 // pred_check
        %p440 = pneg %p200
      $region62: #{oafilter_forward.6} parent=55 // pred_check_branch
        %442 = sbr.rel (%p440) target = $region64
      $region63: #{oafilter_forward.6} parent=55 // pred_region
        %p443 = scmp.lt.s32.totalorder %s20, 1
        %s444 = scalar_select %p443, %s20, 1
        %s445 = smul.addr %s444, 8
        %s446 = scalar_lea.vmem %s7, %s445
      $region64: #{oafilter_forward.6} parent=55 // pred_fallthru
        _
    $region56: #{oafilter_forward.6} parent=5 // pred_fallthru
      _
  $region6: #{oafilter_forward.6} parent=0 // loop_footer
    %s18 = sadd.s32 1, %s14
  $region7: #{oafilter_forward.6} parent=0 // loop_footer_branch
    %13 = sbr.rel target = $region3
  $region8: #{oafilter_forward.6} parent=0 // loop_exit
    _

// kernel: oafilter_forward.7
$region0: #{oafilter_forward.7}
  #allocation0 [shape = 'u32[]', space=smem, size = 0x4, offset = 0x4, fixed_abs, tag = 'smem constant byte address 0x4 - core index']
  #allocation1 [shape = 'u32[72,128]{1,0:T(1,128)}', space=vmem, size = 0x9000, scoped, tag = 'internal scratch']
  %s0 = inlined_call_operand.vmem [shape: bf16[2,8,128], index: 0, kind: input, shape index: {}]
  %s1 = inlined_call_operand.vmem [shape: f32[2,8,128], index: 1, kind: input, shape index: {}]
  %s2 = inlined_call_operand.vmem [shape: f32[8,1], index: 2, kind: input, shape index: {}]
  %s3 = inlined_call_operand.vmem [shape: f32[8,1], index: 3, kind: input, shape index: {}]
  %s4 = inlined_call_operand.vmem [shape: bf16[8,8], index: 4, kind: input, shape index: {}]
  %s5 = inlined_call_operand.vmem [shape: f32[8,1], index: 5, kind: input, shape index: {}]
  %s6 = inlined_call_operand.hbm [shape: f32[2,8,128], index: 6, kind: output, shape index: {}]
  %s7 = sld [smem:[#allocation0]]
  $region57: #{oafilter_forward.7} parent=0
    _
  %s9 = ssub.s32 1, %s7
  %s10 = scalar_select 0, %s9, %s7
  $region1: #{oafilter_forward.7} parent=0
    #allocation2 [shape = 'u8[8192]{0}', space=vmem, size = 0x2000, scoped, tag = 'output window, operand 0']
    #allocation3 [shape = 's32[2]{0}', space=sflag, size = 0x8, scoped, tag = 'scoped memory for oafilter_forward.7']
    %11 = vsyncpa [#allocation3], 0
    %s12 = scalar_lea.sflag [#allocation3], 1
    %13 = vsyncpa %s12, 0
    loop: start=0, step=1, limit=4
    $region2: #{oafilter_forward.7} parent=1 // loop_pre_header
      _
    $region3: #{oafilter_forward.7} parent=1 // loop_header
      %s15 = sphi 0, %s19
      %p16 = scmp.ge.s32.totalorder %s15, 4
      %s25 = sphi 0, %s27
      %s28 = sphi 0, %s25
      %s29 = sphi 0, %s28
      %s45 = sphi 0, %s29
      %s51 = sphi 0, %s53
      %s54 = sphi 0, %s51
      %s55 = sphi 0, %s54
      %s71 = sphi 0, %s55
      %s75 = sphi 0, %s75
      %s77 = sphi 0, %s75
      %s78 = sphi 0, %s77
      %s92 = sphi 0, %s78
      %s96 = sphi 0, %s96
      %s98 = sphi 0, %s96
      %s99 = sphi 0, %s98
      %s113 = sphi 0, %s99
      %s117 = sphi 0, %s117
      %s119 = sphi 0, %s117
      %s120 = sphi 0, %s119
      %s134 = sphi 0, %s120
      %s138 = sphi 0, %s138
      %s140 = sphi 0, %s138
      %s141 = sphi 0, %s140
      %s155 = sphi 0, %s141
      %s161 = sphi 0, %s163
      %s164 = sphi 0, %s161
      %s165 = sphi 0, %s164
      %s181 = sphi 0, %s165
    $region4: #{oafilter_forward.7} parent=1 // loop_header_branch
      %18 = sbr.rel (%p16) target = $region8
    $region5: #{oafilter_forward.7} parent=1 // loop_body
      %s20 = ssub.s32 %s15, 1
      %s21 = ssub.s32 %s15, 2
      %s22 = sadd.s32 %s15, 1
      %s23 = ssub.s32 %s15, %s22
      %p24 = scmp.eq.s32.totalorder %s23, 0
      %s26 = sadd.s32 %s25, 1
      %s27 = scalar_select %p24, %s25, %s26
      %p30 = pneg %p24
      %p31 = scmp.eq.s32.totalorder %s15, 1
      %p32 = por %p30, %p31
      %p33 = scmp.ne.s32.totalorder %s25, %s28
      %p34 = scmp.eq.s32.totalorder %s15, 0
      %p35 = por %p33, %p34
      %p36 = scmp.ne.s32.totalorder %s25, %s28
      %p37 = scmp.eq.s32.totalorder %s20, 1
      %p38 = por %p36, %p37
      %p39 = scmp.ne.s32.totalorder %s28, %s29
      %p40 = scmp.eq.s32.totalorder %s20, 0
      %p41 = por %p39, %p40
      %p42 = scmp.ne.s32.totalorder %s28, %s29
      %p43 = scmp.eq.s32.totalorder %s21, 1
      %p44 = por %p42, %p43
      %p46 = scmp.ne.s32.totalorder %s29, %s45
      %p47 = scmp.eq.s32.totalorder %s21, 0
      %p48 = por %p46, %p47
      %s49 = ssub.s32 %s15, %s22
      %p50 = scmp.eq.s32.totalorder %s49, 0
      %s52 = sadd.s32 %s51, 1
      %s53 = scalar_select %p50, %s51, %s52
      %p56 = pneg %p50
      %p57 = scmp.eq.s32.totalorder %s15, 1
      %p58 = por %p56, %p57
      %p59 = scmp.ne.s32.totalorder %s51, %s54
      %p60 = scmp.eq.s32.totalorder %s15, 0
      %p61 = por %p59, %p60
      %p62 = scmp.ne.s32.totalorder %s51, %s54
      %p63 = scmp.eq.s32.totalorder %s20, 1
      %p64 = por %p62, %p63
      %p65 = scmp.ne.s32.totalorder %s54, %s55
      %p66 = scmp.eq.s32.totalorder %s20, 0
      %p67 = por %p65, %p66
      %p68 = scmp.ne.s32.totalorder %s54, %s55
      %p69 = scmp.eq.s32.totalorder %s21, 1
      %p70 = por %p68, %p69
      %p72 = scmp.ne.s32.totalorder %s55, %s71
      %p73 = scmp.eq.s32.totalorder %s21, 0
      %p74 = por %p72, %p73
      %s76 = sadd.s32 %s75, 1
      %p79 = scmp.eq.s32.totalorder %s15, 1
      %p80 = scmp.ne.s32.totalorder %s75, %s77
      %p81 = scmp.eq.s32.totalorder %s15, 0
      %p82 = por %p80, %p81
      %p83 = scmp.ne.s32.totalorder %s75, %s77
      %p84 = scmp.eq.s32.totalorder %s20, 1
      %p85 = por %p83, %p84
      %p86 = scmp.ne.s32.totalorder %s77, %s78
      %p87 = scmp.eq.s32.totalorder %s20, 0
      %p88 = por %p86, %p87
      %p89 = scmp.ne.s32.totalorder %s77, %s78
      %p90 = scmp.eq.s32.totalorder %s21, 1
      %p91 = por %p89, %p90
      %p93 = scmp.ne.s32.totalorder %s78, %s92
      %p94 = scmp.eq.s32.totalorder %s21, 0
      %p95 = por %p93, %p94
      %s97 = sadd.s32 %s96, 1
      %p100 = scmp.eq.s32.totalorder %s15, 1
      %p101 = scmp.ne.s32.totalorder %s96, %s98
      %p102 = scmp.eq.s32.totalorder %s15, 0
      %p103 = por %p101, %p102
      %p104 = scmp.ne.s32.totalorder %s96, %s98
      %p105 = scmp.eq.s32.totalorder %s20, 1
      %p106 = por %p104, %p105
      %p107 = scmp.ne.s32.totalorder %s98, %s99
      %p108 = scmp.eq.s32.totalorder %s20, 0
      %p109 = por %p107, %p108
      %p110 = scmp.ne.s32.totalorder %s98, %s99
      %p111 = scmp.eq.s32.totalorder %s21, 1
      %p112 = por %p110, %p111
      %p114 = scmp.ne.s32.totalorder %s99, %s113
      %p115 = scmp.eq.s32.totalorder %s21, 0
      %p116 = por %p114, %p115
      %s118 = sadd.s32 %s117, 1
      %p121 = scmp.eq.s32.totalorder %s15, 1
      %p122 = scmp.ne.s32.totalorder %s117, %s119
      %p123 = scmp.eq.s32.totalorder %s15, 0
      %p124 = por %p122, %p123
      %p125 = scmp.ne.s32.totalorder %s117, %s119
      %p126 = scmp.eq.s32.totalorder %s20, 1
      %p127 = por %p125, %p126
      %p128 = scmp.ne.s32.totalorder %s119, %s120
      %p129 = scmp.eq.s32.totalorder %s20, 0
      %p130 = por %p128, %p129
      %p131 = scmp.ne.s32.totalorder %s119, %s120
      %p132 = scmp.eq.s32.totalorder %s21, 1
      %p133 = por %p131, %p132
      %p135 = scmp.ne.s32.totalorder %s120, %s134
      %p136 = scmp.eq.s32.totalorder %s21, 0
      %p137 = por %p135, %p136
      %s139 = sadd.s32 %s138, 1
      %p142 = scmp.eq.s32.totalorder %s15, 1
      %p143 = scmp.ne.s32.totalorder %s138, %s140
      %p144 = scmp.eq.s32.totalorder %s15, 0
      %p145 = por %p143, %p144
      %p146 = scmp.ne.s32.totalorder %s138, %s140
      %p147 = scmp.eq.s32.totalorder %s20, 1
      %p148 = por %p146, %p147
      %p149 = scmp.ne.s32.totalorder %s140, %s141
      %p150 = scmp.eq.s32.totalorder %s20, 0
      %p151 = por %p149, %p150
      %p152 = scmp.ne.s32.totalorder %s140, %s141
      %p153 = scmp.eq.s32.totalorder %s21, 1
      %p154 = por %p152, %p153
      %p156 = scmp.ne.s32.totalorder %s141, %s155
      %p157 = scmp.eq.s32.totalorder %s21, 0
      %p158 = por %p156, %p157
      %s159 = ssub.s32 %s15, %s22
      %p160 = scmp.eq.s32.totalorder %s159, 0
      %s162 = sadd.s32 %s161, 1
      %s163 = scalar_select %p160, %s161, %s162
      %p166 = pneg %p160
      %p167 = scmp.eq.s32.totalorder %s15, 1
      %p168 = por %p166, %p167
      %p169 = scmp.ne.s32.totalorder %s161, %s164
      %p170 = scmp.eq.s32.totalorder %s15, 0
      %p171 = por %p169, %p170
      %p172 = scmp.ne.s32.totalorder %s161, %s164
      %p173 = scmp.eq.s32.totalorder %s20, 1
      %p174 = por %p172, %p173
      %p175 = scmp.ne.s32.totalorder %s164, %s165
      %p176 = scmp.eq.s32.totalorder %s20, 0
      %p177 = por %p175, %p176
      %p178 = scmp.ne.s32.totalorder %s164, %s165
      %p179 = scmp.eq.s32.totalorder %s21, 1
      %p180 = por %p178, %p179
      %p182 = scmp.ne.s32.totalorder %s165, %s181
      %p183 = scmp.eq.s32.totalorder %s21, 0
      %p184 = por %p182, %p183
      %p185 = scmp.le.s32.totalorder 1, %s15
      %p186 = scmp.lt.s32.totalorder %s15, 3
      %p187 = pnand %p185, %p186
      %p188 = pneg %p187
      // Predicated region
      $region9: #{oafilter_forward.7} parent=5 // pred_check
        _
      $region10: #{oafilter_forward.7} parent=5 // pred_check_branch
        %190 = sbr.rel (%p187) target = $region12
      $region11: #{oafilter_forward.7} parent=5 // pred_region
        %s191 = ssub.s32 %s15, 1
        // Predicated region
        $region13: #{oafilter_forward.7} parent=11 // pred_check
          %p192 = pneg %p88
        $region14: #{oafilter_forward.7} parent=11 // pred_check_branch
          %194 = sbr.rel (%p192) target = $region16
        $region15: #{oafilter_forward.7} parent=11 // pred_region
          _
        $region16: #{oafilter_forward.7} parent=11 // pred_fallthru
          _
        // Predicated region
        $region17: #{oafilter_forward.7} parent=11 // pred_check
          %p195 = pneg %p109
        $region18: #{oafilter_forward.7} parent=11 // pred_check_branch
          %197 = sbr.rel (%p195) target = $region20
        $region19: #{oafilter_forward.7} parent=11 // pred_region
          _
        $region20: #{oafilter_forward.7} parent=11 // pred_fallthru
          _
        // Predicated region
        $region21: #{oafilter_forward.7} parent=11 // pred_check
          %p198 = pneg %p130
        $region22: #{oafilter_forward.7} parent=11 // pred_check_branch
          %200 = sbr.rel (%p198) target = $region24
        $region23: #{oafilter_forward.7} parent=11 // pred_region
          _
        $region24: #{oafilter_forward.7} parent=11 // pred_fallthru
          _
        // Predicated region
        $region25: #{oafilter_forward.7} parent=11 // pred_check
          %p201 = pneg %p151
        $region26: #{oafilter_forward.7} parent=11 // pred_check_branch
          %203 = sbr.rel (%p201) target = $region28
        $region27: #{oafilter_forward.7} parent=11 // pred_region
          _
        $region28: #{oafilter_forward.7} parent=11 // pred_fallthru
          _
      $region12: #{oafilter_forward.7} parent=5 // pred_fallthru
        _
      %p204 = scmp.lt.s32.totalorder %s15, 2
      // Predicated region
      $region29: #{oafilter_forward.7} parent=5 // pred_check
        %p205 = pneg %p204
      $region30: #{oafilter_forward.7} parent=5 // pred_check_branch
        %207 = sbr.rel (%p205) target = $region32
      $region31: #{oafilter_forward.7} parent=5 // pred_region
        // Predicated region
        $region33: #{oafilter_forward.7} parent=31 // pred_check
          %p208 = pneg %p35
        $region34: #{oafilter_forward.7} parent=31 // pred_check_branch
          %210 = sbr.rel (%p208) target = $region36
        $region35: #{oafilter_forward.7} parent=31 // pred_region
          %p211 = scmp.lt.s32.totalorder %s15, 1
          %s212 = scalar_select %p211, %s15, 1
          %s213 = smul.addr %s212, 4
          %s214 = scalar_lea.vmem %s0, %s213
        $region36: #{oafilter_forward.7} parent=31 // pred_fallthru
          _
        // Predicated region
        $region37: #{oafilter_forward.7} parent=31 // pred_check
          %p215 = pneg %p61
        $region38: #{oafilter_forward.7} parent=31 // pred_check_branch
          %217 = sbr.rel (%p215) target = $region40
        $region39: #{oafilter_forward.7} parent=31 // pred_region
          %p218 = scmp.lt.s32.totalorder %s15, 1
          %s219 = scalar_select %p218, %s15, 1
          %s220 = smul.addr %s219, 8
          %s221 = scalar_lea.vmem %s1, %s220
        $region40: #{oafilter_forward.7} parent=31 // pred_fallthru
          _
      $region32: #{oafilter_forward.7} parent=5 // pred_fallthru
        _
      %p222 = scmp.le.s32.totalorder 1, %s15
      %p223 = scmp.lt.s32.totalorder %s15, 3
      %p224 = pnand %p222, %p223
      %p225 = pneg %p224
      // Predicated region
      $region41: #{oafilter_forward.7} parent=5 // pred_check
        _
      $region42: #{oafilter_forward.7} parent=5 // pred_check_branch
        %227 = sbr.rel (%p224) target = $region44
      $region43: #{oafilter_forward.7} parent=5 // pred_region
        %s228 = ssub.s32 %s15, 1
        %p229 = scmp.lt.s32.totalorder %s20, 1
        %s230 = scalar_select %p229, %s20, 1
        %s231 = smul.addr %s230, 4
        %s232 = scalar_lea.vmem %s0, %s231
        %p233 = pneg %p41
        %p234 = pneg %p38
        %p235 = scmp.lt.s32.totalorder %s20, 1
        %s236 = scalar_select %p235, %s20, 1
        %s237 = smul.addr %s236, 8
        %s238 = scalar_lea.vmem %s1, %s237
        %p239 = pneg %p67
        %p240 = pneg %p64
        %p241 = pneg %p88
        %p242 = pneg %p85
        %p243 = pneg %p109
        %p244 = pneg %p106
        %p245 = pneg %p130
        %p246 = pneg %p127
        %p247 = pneg %p151
        %p248 = pneg %p148
        %p249 = pneg %p177
        %p250 = pneg %p174
        %s251 = sand.u32 %s164, 1
        %s252 = scalar_lea.sflag [#allocation3], %s251
        %s253 = sand.u32 %s164, 1
        %s254 = smul.addr %s253, 8
        %s255 = scalar_lea.vmem [#allocation2], %s254
        %p256 = scmp.lt.s32.totalorder %s20, 1
        %s257 = scalar_select %p256, %s20, 1
        %s258 = smul.addr %s257, 4
        %s259 = scalar_lea.vmem %s0, %s258
        %p260 = scmp.lt.s32.totalorder %s20, 1
        %s261 = scalar_select %p260, %s20, 1
        %s262 = smul.addr %s261, 8
        %s263 = scalar_lea.vmem %s1, %s262
        %v265 = vld [vmem:[%s4] sm:$0xf]
        %v266 = vld [vmem:[%s5] sm:$0xff]
        %v267 = vld [vmem:[%s2] sm:$0xff]
        %v268 = vld [vmem:[%s3] sm:$0xff]
        %v269 = vld [vmem:[%s259] sm:$0xf]
        %v270 = vunpack.c.l.bf16 %v269
        %272 = vset.pattern.permute.xlu0 0
        %273 = vperm.xlu0 %272, %v267
        %v274 = vpop.permute.xlu0 %273
        %v276 = vmul.f32 %v270, %v274
        %278 = vset.pattern.permute.xlu0 0
        %279 = vperm.xlu0 %278, %v268
        %v280 = vpop.permute.xlu0 %279
        %v282 = vadd.f32 %v276, %v280
        %v283 = vmax.f32 %v282, 0.0
        %v284 = vpack.c.bf16 %v283, %v283
        %286 = vset.pattern.permute.xlu0 0
        %287 = vperm.xlu0 %286, %v266
        %v288 = vpop.permute.xlu0 %287
        %vm290 = vcmask 64512
        %v292 = vsel %vm290, %v265, 0
        %vm294 = vcmask 1043456
        %v296 = vsel %vm294, %v284, 0
        %298 = vmatpush.bf16.msra.mxu0 0
        %299 = vmatpush.bf16.msra.mxu0 0
        %300 = vmatpush.bf16.msra.mxu0 0
        %301 = vmatpush.bf16.msra.mxu0 0
        %302 = vmatpush.bf16.msra.mxu0 0
        %303 = vmatpush.bf16.msra.mxu0 0
        %304 = vmatpush.bf16.msra.mxu0 0
        %305 = vmatpush.bf16.msra.mxu0 %v296
        %306 = vmatmul.bf16.gmra.mxu0 %v292
        %v307 = vpop.f32.mrf.mxu0
        %v308 = vadd.f32 %v288, %v307
        %v309 = vpop.f32.mrf.mxu0
        %310 = vdwg.mxu0
        %v311 = vld [vmem:[%s263] sm:$0xff]
        %v312 = vadd.f32 %v308, %v311
        %313 = vst [vmem:[%s255] sm:$0xff] %v312
        %s314 = sand.u32 %s164, 1
        %s315 = scalar_lea.sflag [#allocation3], %s314
        %s316 = sand.u32 %s164, 1
        %s317 = smul.addr %s316, 8
        %s318 = scalar_lea.vmem [#allocation2], %s317
        // Predicated region
        $region45: #{oafilter_forward.7} parent=43 // pred_check
          %p319 = pneg %p174
        $region46: #{oafilter_forward.7} parent=43 // pred_check_branch
          %321 = sbr.rel (%p319) target = $region48
        $region47: #{oafilter_forward.7} parent=43 // pred_region
          %323 = vsyncadd %s315, 0
          %s324 = smul.addr %s20, 8
          %s325 = scalar_lea.hbm %s6, %s324
          %s327 = sshll.u32 %s318, 4
          %s328 = int_to_ptr.vmem [resolvable:$true] %s327
          %s329 = sshll.u32 %s325, 4
          %s330 = int_to_ptr.hbm [resolvable:$true] %s329
          %332 = dma.vmem_to_hbm [thread:$0]  %s328, 128, %s330, %s315
        $region48: #{oafilter_forward.7} parent=43 // pred_fallthru
          _
      $region44: #{oafilter_forward.7} parent=5 // pred_fallthru
        _
      %p333 = scmp.le.s32.totalorder 2, %s15
      // Predicated region
      $region49: #{oafilter_forward.7} parent=5 // pred_check
        %p334 = pneg %p333
      $region50: #{oafilter_forward.7} parent=5 // pred_check_branch
        %336 = sbr.rel (%p334) target = $region52
      $region51: #{oafilter_forward.7} parent=5 // pred_region
        %s337 = ssub.s32 %s15, 2
        // Predicated region
        $region53: #{oafilter_forward.7} parent=51 // pred_check
          %p338 = pneg %p180
        $region54: #{oafilter_forward.7} parent=51 // pred_check_branch
          %340 = sbr.rel (%p338) target = $region56
        $region55: #{oafilter_forward.7} parent=51 // pred_region
          %s341 = sand.u32 %s165, 1
          %s342 = scalar_lea.sflag [#allocation3], %s341
          %s343 = sand.u32 %s165, 1
          %s344 = smul.addr %s343, 8
          %s345 = scalar_lea.vmem [#allocation2], %s344
          %347 = dma.done %s342, 128
        $region56: #{oafilter_forward.7} parent=51 // pred_fallthru
          _
      $region52: #{oafilter_forward.7} parent=5 // pred_fallthru
        _
    $region6: #{oafilter_forward.7} parent=1 // loop_footer
      %s19 = sadd.s32 1, %s15
    $region7: #{oafilter_forward.7} parent=1 // loop_footer_branch
      %14 = sbr.rel target = $region3
    $region8: #{oafilter_forward.7} parent=1 // loop_exit
      _
    %348 = vsyncpa [#allocation3], 1
    %s349 = scalar_lea.sflag [#allocation3], 1
    %350 = vsyncpa %s349, 1

</llo_original>
